<compile_context>
chip_gen: v7x
topology: tpu7x:2x2x1
jax: 0.10.0
libtpu: 0.0.40
codegen_flags: <defaults>
</compile_context>

<pallas_src>
import functools
import math

import jax
import jax.numpy as jnp
from jax import lax
from jax.experimental import pallas as pl
from jax.experimental.pallas import tpu as pltpu  # noqa: F401  (TPU backend import)


def _layer_norm(x, gamma, beta, eps=1e-5):
    # x: (N, D); gamma/beta: (1, D).  Matches torch.nn.LayerNorm (biased variance, eps=1e-5).
    mean = jnp.mean(x, axis=-1, keepdims=True)
    var = jnp.mean((x - mean) ** 2, axis=-1, keepdims=True)
    return (x - mean) * lax.rsqrt(var + eps) * gamma + beta


def _erf(z):
    # Abramowitz & Stegun 7.1.26 polynomial approximation, |error| <= 1.5e-7.
    # Uses only exp + VPU arithmetic (avoids relying on a lax.erf Mosaic lowering).
    a1, a2, a3, a4, a5 = 0.254829592, -0.284496736, 1.421413741, -1.453152027, 1.061405429
    p = 0.3275911
    za = jnp.abs(z)
    t = 1.0 / (1.0 + p * za)
    poly = ((((a5 * t + a4) * t + a3) * t + a2) * t + a1) * t
    r = 1.0 - poly * jnp.exp(-za * za)
    return jnp.where(z >= 0, r, -r)


def _gelu_exact(x):
    # nn.GELU() default = exact (erf) GELU.
    return 0.5 * x * (1.0 + _erf(x * (1.0 / math.sqrt(2.0))))


def _block_kernel(x_ref, mask_ref, wqkv_ref, wout_ref, bout_ref,
                  ln1g_ref, ln1b_ref, ln2g_ref, ln2b_ref,
                  w1_ref, b1_ref, w2_ref, b2_ref,
                  o_ref, *, num_heads):
    bf16 = jnp.bfloat16
    f32 = jnp.float32
    NH = num_heads

    x = x_ref[...]                                    # (B*T, D) f32 slab
    BT, D = x.shape

    # ---------------- attention branch ----------------
    h = _layer_norm(x, ln1g_ref[...], ln1b_ref[...])
    hb = h.astype(bf16)

    # Head-batched qkv projection: broadcast the (BT, D) activation over the 3*NH weight
    # slabs and use ONE single-batch-dim batched matmul -> (3*NH, BT, DH), f32 accumulation.
    # (1/sqrt(DH) was folded into the q weight columns host-side.)
    hb_b = jnp.broadcast_to(hb[None, :, :], (3 * NH, BT, D))
    qkv = jnp.einsum('gnd,gde->gne', hb_b, wqkv_ref[...],
                     preferred_element_type=f32)       # (3NH, BT, DH)
    q = qkv[0 * NH:1 * NH].astype(bf16)                # (NH, BT, DH), leading-dim slices only
    k = qkv[1 * NH:2 * NH].astype(bf16)
    v = qkv[2 * NH:3 * NH].astype(bf16)

    # Scores for ALL heads in one batched einsum over the folded (B*T) axis.  The additive
    # mask is block-diagonal-causal (0 / -1e30), so cross-batch and future positions get
    # probability exactly 0 after exp underflow.
    att = jnp.einsum('gtd,gsd->gts', q, k,
                     preferred_element_type=f32)       # (NH, BT, BT)
    att = att + mask_ref[...]                          # additive mask, broadcast over heads
    att = att - jnp.max(att, axis=-1, keepdims=True)   # diagonal always unmasked -> safe
    p = jnp.exp(att)
    p = p / jnp.sum(p, axis=-1, keepdims=True)         # exact division (keeps tolerance tight)
    # TODO(synk): attn_dropout is identity here (eval-mode semantics).

    pv = jnp.einsum('gts,gsd->gtd', p.astype(bf16), v,
                    preferred_element_type=f32)        # (NH, BT, DH)

    # Output projection folded over heads: per-head (DH, D) matmul, summed over heads.
    # Mathematically identical to concat-heads followed by (D, D) projection.
    y = jnp.einsum('gnd,gde->gne', pv.astype(bf16), wout_ref[...],
                   preferred_element_type=f32)         # (NH, BT, D)
    y = jnp.sum(y, axis=0) + bout_ref[...]             # (BT, D)
    # TODO(synk): output_dropout is identity here (eval-mode semantics).
    x = x + y

    # ---------------- MLP branch ----------------
    h2 = _layer_norm(x, ln2g_ref[...], ln2b_ref[...])
    m = jnp.dot(h2.astype(bf16), w1_ref[...], preferred_element_type=f32) + b1_ref[...]
    m = _gelu_exact(m)
    m = jnp.dot(m.astype(bf16), w2_ref[...], preferred_element_type=f32) + b2_ref[...]
    # TODO(synk): mlp dropout is identity here (eval-mode semantics).

    o_ref[...] = x + m


@functools.partial(jax.jit, static_argnums=2)
def self_attention_block(x, params, num_heads):
    """x: (B, T, D) float32.  params: dict of weights (see _init_params)."""
    B, T, D = x.shape
    NH = num_heads
    DH = D // NH
    bf16 = jnp.bfloat16

    # Fold 1/sqrt(DH) into the q-block columns of w_qkv (f32, before the bf16 cast).
    scale = 1.0 / math.sqrt(DH)
    w_qkv = params["w_qkv"]
    w_qkv = jnp.concatenate([w_qkv[:, :D] * scale, w_qkv[:, D:]], axis=1)

    # Host-side head-major weight re-layouts (plain XLA; keeps the kernel free of transposes).
    #   (D, 3D) -> (3*NH, D, DH): batch index g = chunk*NH + head, chunk in {q, k, v}.
    w_qkv_heads = w_qkv.reshape(D, 3, NH, DH).transpose(1, 2, 0, 3).reshape(3 * NH, D, DH)
    #   (D, D) -> (NH, DH, D): rows of w_out are indexed by the concat-of-heads feature axis.
    w_out_heads = params["w_out"].reshape(NH, DH, D)

    # Precomputed additive attention mask over the folded (B*T) axis:
    # causal within a batch element, fully masked across batch elements (block-diagonal).
    n = jnp.arange(B * T)
    allowed = ((n[:, None] // T) == (n[None, :] // T)) & (n[:, None] >= n[None, :])
    add_mask = jnp.where(allowed, 0.0, -1e30).astype(jnp.float32)   # (BT, BT)

    # MXU-feeding weights are cast to bf16 host-side (halves their HBM->VMEM traffic);
    # biases and LayerNorm params stay f32 (applied after f32 accumulation).
    args = [
        x.reshape(B * T, D),
        add_mask,
        w_qkv_heads.astype(bf16),
        w_out_heads.astype(bf16),
        params["b_out"],
        params["ln1_g"], params["ln1_b"], params["ln2_g"], params["ln2_b"],
        params["w_mlp1"].astype(bf16), params["b_mlp1"],
        params["w_mlp2"].astype(bf16), params["b_mlp2"],
    ]

    kernel = functools.partial(_block_kernel, num_heads=NH)
    out = pl.pallas_call(
        kernel,
        out_shape=jax.ShapeDtypeStruct((B * T, D), jnp.float32),
        # No grid: single invocation, all operands as whole-array VMEM blocks.
    )(*args)
    return out.reshape(B, T, D)


def _init_params(key, embed_dim):
    D = embed_dim
    ks = jax.random.split(key, 7)
    s = 0.05
    return {
        # attention (qkv projection has no bias, matching the PyTorch module)
        "w_qkv": s * jax.random.normal(ks[0], (D, 3 * D), jnp.float32),
        "w_out": s * jax.random.normal(ks[1], (D, D), jnp.float32),
        "b_out": s * jax.random.normal(ks[2], (1, D), jnp.float32),
        # layer norms (default torch init: gamma=1, beta=0)
        "ln1_g": jnp.ones((1, D), jnp.float32),
        "ln1_b": jnp.zeros((1, D), jnp.float32),
        "ln2_g": jnp.ones((1, D), jnp.float32),
        "ln2_b": jnp.zeros((1, D), jnp.float32),
        # MLP (activation is nn.GELU -> mult = 1, hidden = 4*D)
        "w_mlp1": s * jax.random.normal(ks[3], (D, 4 * D), jnp.float32),
        "b_mlp1": s * jax.random.normal(ks[4], (1, 4 * D), jnp.float32),
        "w_mlp2": s * jax.random.normal(ks[5], (4 * D, D), jnp.float32),
        "b_mlp2": s * jax.random.normal(ks[6], (1, D), jnp.float32),
    }


def _reference(x, p, num_heads):
    """Pure-JAX f32 reference of the same forward pass (matches the PyTorch module)."""
    B, T, D = x.shape
    DH = D // num_heads

    def ln(v, g, b, eps=1e-5):
        mu = jnp.mean(v, -1, keepdims=True)
        var = jnp.mean((v - mu) ** 2, -1, keepdims=True)
        return (v - mu) / jnp.sqrt(var + eps) * g + b

    h = ln(x, p["ln1_g"], p["ln1_b"])
    qkv = h @ p["w_qkv"]                       # no qkv bias (bias=False in the module)
    q, k, v = jnp.split(qkv, 3, axis=-1)
    q = q.reshape(B, T, num_heads, DH).transpose(0, 2, 1, 3)
    k = k.reshape(B, T, num_heads, DH).transpose(0, 2, 1, 3)
    v = v.reshape(B, T, num_heads, DH).transpose(0, 2, 1, 3)
    att = jnp.einsum("bhtd,bhsd->bhts", q, k) / math.sqrt(DH)
    mask = jnp.tril(jnp.ones((T, T), bool))
    att = jnp.where(mask, att, -jnp.inf)
    att = jax.nn.softmax(att, axis=-1)
    y = jnp.einsum("bhts,bhsd->bhtd", att, v)
    y = y.transpose(0, 2, 1, 3).reshape(B, T, D)
    y = y @ p["w_out"] + p["b_out"]
    x = x + y
    h2 = ln(x, p["ln2_g"], p["ln2_b"])
    m = jax.nn.gelu(h2 @ p["w_mlp1"] + p["b_mlp1"], approximate=False)
    m = m @ p["w_mlp2"] + p["b_mlp2"]
    return x + m


if __name__ == "__main__":
    B, T, D, NH = 2, 8, 32, 4          # context_length = T = 8, embed_dim = 32, num_heads = 4
    key = jax.random.PRNGKey(0)
    kx, kp = jax.random.split(key)
    x = jax.random.normal(kx, (B, T, D), jnp.float32)
    params = _init_params(kp, D)

    out = jax.block_until_ready(self_attention_block(x, params, NH))
    ref = _reference(x, params, NH)

    assert out.shape == (B, T, D)
    err = float(jnp.max(jnp.abs(out - ref)))
    # Tolerance accounts only for bf16 MXU operands (f32 accumulation); softmax uses exact
    # division and all elementwise math is f32, so this is much tighter than before.
    assert err < 1e-2, f"mismatch vs pure-JAX reference: max abs err = {err}"

    print("KERNEL_OK")
</pallas_src>

<mosaic_0001>
module attributes {stable_mosaic.version = 11 : i64} {
  func.func @_block_kernel(%arg0: memref<16x32xf32, #tpu.memory_space<vmem>>, %arg1: memref<16x16xf32, #tpu.memory_space<vmem>>, %arg2: memref<12x32x8xbf16, #tpu.memory_space<vmem>>, %arg3: memref<4x8x32xbf16, #tpu.memory_space<vmem>>, %arg4: memref<1x32xf32, #tpu.memory_space<vmem>>, %arg5: memref<1x32xf32, #tpu.memory_space<vmem>>, %arg6: memref<1x32xf32, #tpu.memory_space<vmem>>, %arg7: memref<1x32xf32, #tpu.memory_space<vmem>>, %arg8: memref<1x32xf32, #tpu.memory_space<vmem>>, %arg9: memref<32x128xbf16, #tpu.memory_space<vmem>>, %arg10: memref<1x128xf32, #tpu.memory_space<vmem>>, %arg11: memref<128x32xbf16, #tpu.memory_space<vmem>>, %arg12: memref<1x32xf32, #tpu.memory_space<vmem>>, %arg13: memref<16x32xf32, #tpu.memory_space<vmem>>) attributes {dimension_semantics = [], scalar_prefetch = 0 : i64, scratch_operands = 0 : i64, tpu.core_type = #tpu.core_type<tc>} {
    %c0 = arith.constant 0 : index
    %c0_0 = arith.constant 0 : index
    %0 = vector.load %arg0[%c0, %c0_0] : memref<16x32xf32, #tpu.memory_space<vmem>>, vector<16x32xf32>
    %c0_1 = arith.constant 0 : index
    %c0_2 = arith.constant 0 : index
    %1 = vector.load %arg5[%c0_1, %c0_2] : memref<1x32xf32, #tpu.memory_space<vmem>>, vector<1x32xf32>
    %c0_3 = arith.constant 0 : index
    %c0_4 = arith.constant 0 : index
    %2 = vector.load %arg6[%c0_3, %c0_4] : memref<1x32xf32, #tpu.memory_space<vmem>>, vector<1x32xf32>
    %cst = arith.constant dense<0.000000e+00> : vector<16xf32>
    %3 = vector.multi_reduction <add>, %0, %cst [1] : vector<16x32xf32> to vector<16xf32>
    %4 = vector.shape_cast %3 : vector<16xf32> to vector<16x1xf32>
    %cst_5 = arith.constant 3.200000e+01 : f32
    %5 = vector.broadcast %cst_5 : f32 to vector<16x1xf32>
    %6 = arith.divf %4, %5 : vector<16x1xf32>
    %7 = vector.broadcast %6 : vector<16x1xf32> to vector<16x32xf32>
    %8 = arith.subf %0, %7 : vector<16x32xf32>
    %9 = arith.mulf %8, %8 : vector<16x32xf32>
    %cst_6 = arith.constant dense<0.000000e+00> : vector<16xf32>
    %10 = vector.multi_reduction <add>, %9, %cst_6 [1] : vector<16x32xf32> to vector<16xf32>
    %11 = vector.shape_cast %10 : vector<16xf32> to vector<16x1xf32>
    %cst_7 = arith.constant 3.200000e+01 : f32
    %12 = vector.broadcast %cst_7 : f32 to vector<16x1xf32>
    %13 = arith.divf %11, %12 : vector<16x1xf32>
    %14 = vector.broadcast %6 : vector<16x1xf32> to vector<16x32xf32>
    %15 = arith.subf %0, %14 : vector<16x32xf32>
    %cst_8 = arith.constant 9.99999974E-6 : f32
    %16 = vector.broadcast %cst_8 : f32 to vector<16x1xf32>
    %17 = arith.addf %13, %16 : vector<16x1xf32>
    %18 = math.rsqrt %17 : vector<16x1xf32>
    %19 = vector.broadcast %18 : vector<16x1xf32> to vector<16x32xf32>
    %20 = arith.mulf %15, %19 : vector<16x32xf32>
    %21 = vector.broadcast %1 : vector<1x32xf32> to vector<16x32xf32>
    %22 = arith.mulf %20, %21 : vector<16x32xf32>
    %23 = vector.broadcast %2 : vector<1x32xf32> to vector<16x32xf32>
    %24 = arith.addf %22, %23 : vector<16x32xf32>
    %25 = arith.truncf %24 : vector<16x32xf32> to vector<16x32xbf16>
    %26 = vector.shape_cast %25 : vector<16x32xbf16> to vector<1x16x32xbf16>
    %27 = vector.shape_cast %26 : vector<1x16x32xbf16> to vector<1x16x32xbf16>
    %28 = vector.broadcast %27 : vector<1x16x32xbf16> to vector<12x16x32xbf16>
    %c0_9 = arith.constant 0 : index
    %c0_10 = arith.constant 0 : index
    %c0_11 = arith.constant 0 : index
    %29 = vector.load %arg2[%c0_9, %c0_10, %c0_11] : memref<12x32x8xbf16, #tpu.memory_space<vmem>>, vector<12x32x8xbf16>
    "tpu.trace_start"() <{level = 10 : i32, message = "gnd,gde->gne"}> : () -> ()
    %cst_12 = arith.constant dense<0.000000e+00> : vector<12x16x8xf32>
    %30 = tpu.matmul %28, %29, %cst_12 {dimension_numbers = #tpu.dot_dimension_numbers<[2], [1], [1], [2], [0, 0, 0, 1, 1, 2], [0], [0]>} : vector<12x16x32xbf16>, vector<12x32x8xbf16>, vector<12x16x8xf32> -> vector<12x16x8xf32>
    "tpu.trace_stop"() : () -> ()
    %31 = vector.extract_strided_slice %30 {offsets = [0, 0, 0], sizes = [4, 16, 8], strides = [1, 1, 1]} : vector<12x16x8xf32> to vector<4x16x8xf32>
    %32 = arith.truncf %31 : vector<4x16x8xf32> to vector<4x16x8xbf16>
    %33 = vector.extract_strided_slice %30 {offsets = [4, 0, 0], sizes = [4, 16, 8], strides = [1, 1, 1]} : vector<12x16x8xf32> to vector<4x16x8xf32>
    %34 = arith.truncf %33 : vector<4x16x8xf32> to vector<4x16x8xbf16>
    %35 = vector.extract_strided_slice %30 {offsets = [8, 0, 0], sizes = [4, 16, 8], strides = [1, 1, 1]} : vector<12x16x8xf32> to vector<4x16x8xf32>
    %36 = arith.truncf %35 : vector<4x16x8xf32> to vector<4x16x8xbf16>
    "tpu.trace_start"() <{level = 10 : i32, message = "gtd,gsd->gts"}> : () -> ()
    %cst_13 = arith.constant dense<0.000000e+00> : vector<4x16x16xf32>
    %37 = tpu.matmul %32, %34, %cst_13 {dimension_numbers = #tpu.dot_dimension_numbers<[2], [2], [1], [1], [0, 0, 0, 1, 1, 1], [0], [0]>} : vector<4x16x8xbf16>, vector<4x16x8xbf16>, vector<4x16x16xf32> -> vector<4x16x16xf32>
    "tpu.trace_stop"() : () -> ()
    %c0_14 = arith.constant 0 : index
    %c0_15 = arith.constant 0 : index
    %38 = vector.load %arg1[%c0_14, %c0_15] : memref<16x16xf32, #tpu.memory_space<vmem>>, vector<16x16xf32>
    %39 = vector.shape_cast %38 : vector<16x16xf32> to vector<1x16x16xf32>
    %40 = vector.broadcast %39 : vector<1x16x16xf32> to vector<4x16x16xf32>
    %41 = arith.addf %37, %40 : vector<4x16x16xf32>
    %cst_16 = arith.constant dense<0xFF800000> : vector<4x16xf32>
    %42 = vector.multi_reduction <maximumf>, %41, %cst_16 [2] : vector<4x16x16xf32> to vector<4x16xf32>
    %43 = vector.shape_cast %42 : vector<4x16xf32> to vector<4x16x1xf32>
    %44 = vector.broadcast %43 : vector<4x16x1xf32> to vector<4x16x16xf32>
    %45 = arith.subf %41, %44 : vector<4x16x16xf32>
    %46 = math.exp %45 : vector<4x16x16xf32>
    %cst_17 = arith.constant dense<0.000000e+00> : vector<4x16xf32>
    %47 = vector.multi_reduction <add>, %46, %cst_17 [2] : vector<4x16x16xf32> to vector<4x16xf32>
    %48 = vector.shape_cast %47 : vector<4x16xf32> to vector<4x16x1xf32>
    %49 = vector.broadcast %48 : vector<4x16x1xf32> to vector<4x16x16xf32>
    %50 = arith.divf %46, %49 : vector<4x16x16xf32>
    %51 = arith.truncf %50 : vector<4x16x16xf32> to vector<4x16x16xbf16>
    "tpu.trace_start"() <{level = 10 : i32, message = "gts,gsd->gtd"}> : () -> ()
    %cst_18 = arith.constant dense<0.000000e+00> : vector<4x16x8xf32>
    %52 = tpu.matmul %51, %36, %cst_18 {dimension_numbers = #tpu.dot_dimension_numbers<[2], [1], [1], [2], [0, 0, 0, 1, 1, 2], [0], [0]>} : vector<4x16x16xbf16>, vector<4x16x8xbf16>, vector<4x16x8xf32> -> vector<4x16x8xf32>
    "tpu.trace_stop"() : () -> ()
    %53 = arith.truncf %52 : vector<4x16x8xf32> to vector<4x16x8xbf16>
    %c0_19 = arith.constant 0 : index
    %c0_20 = arith.constant 0 : index
    %c0_21 = arith.constant 0 : index
    %54 = vector.load %arg3[%c0_19, %c0_20, %c0_21] : memref<4x8x32xbf16, #tpu.memory_space<vmem>>, vector<4x8x32xbf16>
    "tpu.trace_start"() <{level = 10 : i32, message = "gnd,gde->gne"}> : () -> ()
    %cst_22 = arith.constant dense<0.000000e+00> : vector<4x16x32xf32>
    %55 = tpu.matmul %53, %54, %cst_22 {dimension_numbers = #tpu.dot_dimension_numbers<[2], [1], [1], [2], [0, 0, 0, 1, 1, 2], [0], [0]>} : vector<4x16x8xbf16>, vector<4x8x32xbf16>, vector<4x16x32xf32> -> vector<4x16x32xf32>
    "tpu.trace_stop"() : () -> ()
    %cst_23 = arith.constant dense<0.000000e+00> : vector<16x32xf32>
    %56 = vector.multi_reduction <add>, %55, %cst_23 [0] : vector<4x16x32xf32> to vector<16x32xf32>
    %c0_24 = arith.constant 0 : index
    %c0_25 = arith.constant 0 : index
    %57 = vector.load %arg4[%c0_24, %c0_25] : memref<1x32xf32, #tpu.memory_space<vmem>>, vector<1x32xf32>
    %58 = vector.broadcast %57 : vector<1x32xf32> to vector<16x32xf32>
    %59 = arith.addf %56, %58 : vector<16x32xf32>
    %60 = arith.addf %0, %59 : vector<16x32xf32>
    %c0_26 = arith.constant 0 : index
    %c0_27 = arith.constant 0 : index
    %61 = vector.load %arg7[%c0_26, %c0_27] : memref<1x32xf32, #tpu.memory_space<vmem>>, vector<1x32xf32>
    %c0_28 = arith.constant 0 : index
    %c0_29 = arith.constant 0 : index
    %62 = vector.load %arg8[%c0_28, %c0_29] : memref<1x32xf32, #tpu.memory_space<vmem>>, vector<1x32xf32>
    %cst_30 = arith.constant dense<0.000000e+00> : vector<16xf32>
    %63 = vector.multi_reduction <add>, %60, %cst_30 [1] : vector<16x32xf32> to vector<16xf32>
    %64 = vector.shape_cast %63 : vector<16xf32> to vector<16x1xf32>
    %cst_31 = arith.constant 3.200000e+01 : f32
    %65 = vector.broadcast %cst_31 : f32 to vector<16x1xf32>
    %66 = arith.divf %64, %65 : vector<16x1xf32>
    %67 = vector.broadcast %66 : vector<16x1xf32> to vector<16x32xf32>
    %68 = arith.subf %60, %67 : vector<16x32xf32>
    %69 = arith.mulf %68, %68 : vector<16x32xf32>
    %cst_32 = arith.constant dense<0.000000e+00> : vector<16xf32>
    %70 = vector.multi_reduction <add>, %69, %cst_32 [1] : vector<16x32xf32> to vector<16xf32>
    %71 = vector.shape_cast %70 : vector<16xf32> to vector<16x1xf32>
    %cst_33 = arith.constant 3.200000e+01 : f32
    %72 = vector.broadcast %cst_33 : f32 to vector<16x1xf32>
    %73 = arith.divf %71, %72 : vector<16x1xf32>
    %74 = vector.broadcast %66 : vector<16x1xf32> to vector<16x32xf32>
    %75 = arith.subf %60, %74 : vector<16x32xf32>
    %cst_34 = arith.constant 9.99999974E-6 : f32
    %76 = vector.broadcast %cst_34 : f32 to vector<16x1xf32>
    %77 = arith.addf %73, %76 : vector<16x1xf32>
    %78 = math.rsqrt %77 : vector<16x1xf32>
    %79 = vector.broadcast %78 : vector<16x1xf32> to vector<16x32xf32>
    %80 = arith.mulf %75, %79 : vector<16x32xf32>
    %81 = vector.broadcast %61 : vector<1x32xf32> to vector<16x32xf32>
    %82 = arith.mulf %80, %81 : vector<16x32xf32>
    %83 = vector.broadcast %62 : vector<1x32xf32> to vector<16x32xf32>
    %84 = arith.addf %82, %83 : vector<16x32xf32>
    %85 = arith.truncf %84 : vector<16x32xf32> to vector<16x32xbf16>
    %c0_35 = arith.constant 0 : index
    %c0_36 = arith.constant 0 : index
    %86 = vector.load %arg9[%c0_35, %c0_36] : memref<32x128xbf16, #tpu.memory_space<vmem>>, vector<32x128xbf16>
    %cst_37 = arith.constant dense<0.000000e+00> : vector<16x128xf32>
    %87 = tpu.matmul %85, %86, %cst_37 {dimension_numbers = #tpu.dot_dimension_numbers<[1], [0], [0], [1], [0, 0, 1, 1], [], []>} : vector<16x32xbf16>, vector<32x128xbf16>, vector<16x128xf32> -> vector<16x128xf32>
    %c0_38 = arith.constant 0 : index
    %c0_39 = arith.constant 0 : index
    %88 = vector.load %arg10[%c0_38, %c0_39] : memref<1x128xf32, #tpu.memory_space<vmem>>, vector<1x128xf32>
    %89 = vector.broadcast %88 : vector<1x128xf32> to vector<16x128xf32>
    %90 = arith.addf %87, %89 : vector<16x128xf32>
    %cst_40 = arith.constant 5.000000e-01 : f32
    %91 = vector.broadcast %cst_40 : f32 to vector<16x128xf32>
    %92 = arith.mulf %91, %90 : vector<16x128xf32>
    %cst_41 = arith.constant 0.707106769 : f32
    %93 = vector.broadcast %cst_41 : f32 to vector<16x128xf32>
    %94 = arith.mulf %90, %93 : vector<16x128xf32>
    %95 = math.absf %94 : vector<16x128xf32>
    %cst_42 = arith.constant 0.327591091 : f32
    %96 = vector.broadcast %cst_42 : f32 to vector<16x128xf32>
    %97 = arith.mulf %96, %95 : vector<16x128xf32>
    %cst_43 = arith.constant 1.000000e+00 : f32
    %98 = vector.broadcast %cst_43 : f32 to vector<16x128xf32>
    %99 = arith.addf %98, %97 : vector<16x128xf32>
    %cst_44 = arith.constant 1.000000e+00 : f32
    %100 = vector.broadcast %cst_44 : f32 to vector<16x128xf32>
    %101 = arith.divf %100, %99 : vector<16x128xf32>
    %cst_45 = arith.constant 1.06140542 : f32
    %102 = vector.broadcast %cst_45 : f32 to vector<16x128xf32>
    %103 = arith.mulf %102, %101 : vector<16x128xf32>
    %cst_46 = arith.constant -1.45315206 : f32
    %104 = vector.broadcast %cst_46 : f32 to vector<16x128xf32>
    %105 = arith.addf %103, %104 : vector<16x128xf32>
    %106 = arith.mulf %105, %101 : vector<16x128xf32>
    %cst_47 = arith.constant 1.42141378 : f32
    %107 = vector.broadcast %cst_47 : f32 to vector<16x128xf32>
    %108 = arith.addf %106, %107 : vector<16x128xf32>
    %109 = arith.mulf %108, %101 : vector<16x128xf32>
    %cst_48 = arith.constant -0.284496725 : f32
    %110 = vector.broadcast %cst_48 : f32 to vector<16x128xf32>
    %111 = arith.addf %109, %110 : vector<16x128xf32>
    %112 = arith.mulf %111, %101 : vector<16x128xf32>
    %cst_49 = arith.constant 0.254829586 : f32
    %113 = vector.broadcast %cst_49 : f32 to vector<16x128xf32>
    %114 = arith.addf %112, %113 : vector<16x128xf32>
    %115 = arith.mulf %114, %101 : vector<16x128xf32>
    %cst_50 = arith.constant 0.000000e+00 : f32
    %116 = vector.broadcast %cst_50 : f32 to vector<16x128xf32>
    %117 = arith.subf %116, %95 : vector<16x128xf32>
    %118 = arith.mulf %117, %95 : vector<16x128xf32>
    %119 = math.exp %118 : vector<16x128xf32>
    %120 = arith.mulf %115, %119 : vector<16x128xf32>
    %cst_51 = arith.constant 1.000000e+00 : f32
    %121 = vector.broadcast %cst_51 : f32 to vector<16x128xf32>
    %122 = arith.subf %121, %120 : vector<16x128xf32>
    %cst_52 = arith.constant 0.000000e+00 : f32
    %123 = vector.broadcast %cst_52 : f32 to vector<16x128xf32>
    %124 = arith.cmpf oge, %94, %123 : vector<16x128xf32>
    %cst_53 = arith.constant 0.000000e+00 : f32
    %125 = vector.broadcast %cst_53 : f32 to vector<16x128xf32>
    %126 = arith.subf %125, %122 : vector<16x128xf32>
    %127 = arith.select %124, %122, %126 : vector<16x128xi1>, vector<16x128xf32>
    %cst_54 = arith.constant 1.000000e+00 : f32
    %128 = vector.broadcast %cst_54 : f32 to vector<16x128xf32>
    %129 = arith.addf %128, %127 : vector<16x128xf32>
    %130 = arith.mulf %92, %129 : vector<16x128xf32>
    %131 = arith.truncf %130 : vector<16x128xf32> to vector<16x128xbf16>
    %c0_55 = arith.constant 0 : index
    %c0_56 = arith.constant 0 : index
    %132 = vector.load %arg11[%c0_55, %c0_56] : memref<128x32xbf16, #tpu.memory_space<vmem>>, vector<128x32xbf16>
    %cst_57 = arith.constant dense<0.000000e+00> : vector<16x32xf32>
    %133 = tpu.matmul %131, %132, %cst_57 {dimension_numbers = #tpu.dot_dimension_numbers<[1], [0], [0], [1], [0, 0, 1, 1], [], []>} : vector<16x128xbf16>, vector<128x32xbf16>, vector<16x32xf32> -> vector<16x32xf32>
    %c0_58 = arith.constant 0 : index
    %c0_59 = arith.constant 0 : index
    %134 = vector.load %arg12[%c0_58, %c0_59] : memref<1x32xf32, #tpu.memory_space<vmem>>, vector<1x32xf32>
    %135 = vector.broadcast %134 : vector<1x32xf32> to vector<16x32xf32>
    %136 = arith.addf %133, %135 : vector<16x32xf32>
    %137 = arith.addf %60, %136 : vector<16x32xf32>
    %c0_60 = arith.constant 0 : index
    %c0_61 = arith.constant 0 : index
    %138 = vector.load %arg13[%c0_60, %c0_61] : memref<16x32xf32, #tpu.memory_space<vmem>>, vector<16x32xf32>
    tpu.vector_store %arg13[%c0_60, %c0_61], %137 {strides = array<i32>} : memref<16x32xf32, #tpu.memory_space<vmem>>, vector<16x32xf32>,
    return
  }
}

</mosaic_0001>

<llo_original>
// kernel: self_attention_block.1
$region0: #{self_attention_block.1}
  #allocation0 [shape = 'u32[]', space=smem, size = 0x4, offset = 0x4, fixed_abs, tag = 'smem constant byte address 0x4 - core index']
  #allocation1 [shape = 'u32[144,128]{1,0:T(1,128)}', space=vmem, size = 0x12000, scoped, tag = 'internal scratch']
  %s0 = inlined_call_operand.vmem [shape: f32[16,32], index: 0, kind: input, shape index: {}]
  %s1 = inlined_call_operand.vmem [shape: f32[16,16], index: 1, kind: input, shape index: {}]
  %s2 = inlined_call_operand.vmem [shape: bf16[12,32,8], index: 2, kind: input, shape index: {}]
  %s3 = inlined_call_operand.vmem [shape: bf16[4,8,32], index: 3, kind: input, shape index: {}]
  %s4 = inlined_call_operand.vmem [shape: f32[1,32], index: 4, kind: input, shape index: {}]
  %s5 = inlined_call_operand.vmem [shape: f32[1,32], index: 5, kind: input, shape index: {}]
  %s6 = inlined_call_operand.vmem [shape: f32[1,32], index: 6, kind: input, shape index: {}]
  %s7 = inlined_call_operand.vmem [shape: f32[1,32], index: 7, kind: input, shape index: {}]
  %s8 = inlined_call_operand.vmem [shape: f32[1,32], index: 8, kind: input, shape index: {}]
  %s9 = inlined_call_operand.vmem [shape: bf16[32,128], index: 9, kind: input, shape index: {}]
  %s10 = inlined_call_operand.vmem [shape: f32[1,128], index: 10, kind: input, shape index: {}]
  %s11 = inlined_call_operand.vmem [shape: bf16[128,32], index: 11, kind: input, shape index: {}]
  %s12 = inlined_call_operand.vmem [shape: f32[1,32], index: 12, kind: input, shape index: {}]
  %s13 = inlined_call_operand.hbm [shape: f32[16,32], index: 13, kind: output, shape index: {}]
  %s14 = sld [smem:[#allocation0]]
  $region62: #{self_attention_block.1} parent=0
    _
  %s16 = ssub.s32 1, %s14
  %s17 = scalar_select 0, %s16, %s14
  $region1: #{self_attention_block.1} parent=0
    #allocation2 [shape = 'u8[8192]{0}', space=vmem, size = 0x2000, scoped, tag = 'output window, operand 0, single buffered']
    #allocation3 [shape = 's32[1]{0}', space=sflag, size = 0x4, scoped, tag = 'scoped memory for self_attention_block.1']
    %18 = vsyncpa [#allocation3], 0
    // Predicated region
    $region2: #{self_attention_block.1} parent=1 // pred_check
      _
    $region3: #{self_attention_block.1} parent=1 // pred_check_branch
      %20 = sbr.rel (0) target = $region5
    $region4: #{self_attention_block.1} parent=1 // pred_region
      _
    $region5: #{self_attention_block.1} parent=1 // pred_fallthru
      _
    // Predicated region
    $region6: #{self_attention_block.1} parent=1 // pred_check
      _
    $region7: #{self_attention_block.1} parent=1 // pred_check_branch
      %22 = sbr.rel (0) target = $region9
    $region8: #{self_attention_block.1} parent=1 // pred_region
      _
    $region9: #{self_attention_block.1} parent=1 // pred_fallthru
      _
    // Predicated region
    $region10: #{self_attention_block.1} parent=1 // pred_check
      _
    $region11: #{self_attention_block.1} parent=1 // pred_check_branch
      %24 = sbr.rel (0) target = $region13
    $region12: #{self_attention_block.1} parent=1 // pred_region
      _
    $region13: #{self_attention_block.1} parent=1 // pred_fallthru
      _
    // Predicated region
    $region14: #{self_attention_block.1} parent=1 // pred_check
      _
    $region15: #{self_attention_block.1} parent=1 // pred_check_branch
      %26 = sbr.rel (0) target = $region17
    $region16: #{self_attention_block.1} parent=1 // pred_region
      _
    $region17: #{self_attention_block.1} parent=1 // pred_fallthru
      _
    // Predicated region
    $region18: #{self_attention_block.1} parent=1 // pred_check
      _
    $region19: #{self_attention_block.1} parent=1 // pred_check_branch
      %28 = sbr.rel (0) target = $region21
    $region20: #{self_attention_block.1} parent=1 // pred_region
      _
    $region21: #{self_attention_block.1} parent=1 // pred_fallthru
      _
    // Predicated region
    $region22: #{self_attention_block.1} parent=1 // pred_check
      _
    $region23: #{self_attention_block.1} parent=1 // pred_check_branch
      %30 = sbr.rel (0) target = $region25
    $region24: #{self_attention_block.1} parent=1 // pred_region
      _
    $region25: #{self_attention_block.1} parent=1 // pred_fallthru
      _
    // Predicated region
    $region26: #{self_attention_block.1} parent=1 // pred_check
      _
    $region27: #{self_attention_block.1} parent=1 // pred_check_branch
      %32 = sbr.rel (0) target = $region29
    $region28: #{self_attention_block.1} parent=1 // pred_region
      _
    $region29: #{self_attention_block.1} parent=1 // pred_fallthru
      _
    // Predicated region
    $region30: #{self_attention_block.1} parent=1 // pred_check
      _
    $region31: #{self_attention_block.1} parent=1 // pred_check_branch
      %34 = sbr.rel (0) target = $region33
    $region32: #{self_attention_block.1} parent=1 // pred_region
      _
    $region33: #{self_attention_block.1} parent=1 // pred_fallthru
      _
    // Predicated region
    $region34: #{self_attention_block.1} parent=1 // pred_check
      _
    $region35: #{self_attention_block.1} parent=1 // pred_check_branch
      %36 = sbr.rel (0) target = $region37
    $region36: #{self_attention_block.1} parent=1 // pred_region
      _
    $region37: #{self_attention_block.1} parent=1 // pred_fallthru
      _
    // Predicated region
    $region38: #{self_attention_block.1} parent=1 // pred_check
      _
    $region39: #{self_attention_block.1} parent=1 // pred_check_branch
      %38 = sbr.rel (0) target = $region41
    $region40: #{self_attention_block.1} parent=1 // pred_region
      _
    $region41: #{self_attention_block.1} parent=1 // pred_fallthru
      _
    // Predicated region
    $region42: #{self_attention_block.1} parent=1 // pred_check
      _
    $region43: #{self_attention_block.1} parent=1 // pred_check_branch
      %40 = sbr.rel (0) target = $region45
    $region44: #{self_attention_block.1} parent=1 // pred_region
      _
    $region45: #{self_attention_block.1} parent=1 // pred_fallthru
      _
    // Predicated region
    $region46: #{self_attention_block.1} parent=1 // pred_check
      _
    $region47: #{self_attention_block.1} parent=1 // pred_check_branch
      %42 = sbr.rel (0) target = $region49
    $region48: #{self_attention_block.1} parent=1 // pred_region
      _
    $region49: #{self_attention_block.1} parent=1 // pred_fallthru
      _
    // Predicated region
    $region50: #{self_attention_block.1} parent=1 // pred_check
      _
    $region51: #{self_attention_block.1} parent=1 // pred_check_branch
      %44 = sbr.rel (0) target = $region53
    $region52: #{self_attention_block.1} parent=1 // pred_region
      _
    $region53: #{self_attention_block.1} parent=1 // pred_fallthru
      _
    %v46 = vld [vmem:[%s0] sm:$0xff]
    %v47 = vld [vmem:[%s0 + $0x8] sm:$0xff]
    %v48 = vld [vmem:[%s5] sm:$0x1]
    %v49 = vld [vmem:[%s6] sm:$0x1]
    %vm50 = vcmask 261120
    %v51 = vsel %vm50, %v46, 0.0
    %52 = vadd.xlane.f32.xlu0 %v51
    %v53 = vpop.xlane.xlu0 %52
    %v54 = vsel %vm50, %v47, 0.0
    %55 = vadd.xlane.f32.xlu0 %v54
    %v56 = vpop.xlane.xlu0 %55
    %v57 = vrcp.pop 32.0
    %v58 = vmul.f32 %v53, %v57
    %v59 = vmul.f32 %v56, %v57
    %v60 = vsub.f32 %v46, %v58
    %v61 = vsub.f32 %v47, %v59
    %v62 = vmul.f32 %v60, %v60
    %v63 = vmul.f32 %v61, %v61
    %v64 = vsel %vm50, %v62, 0.0
    %65 = vadd.xlane.f32.xlu0 %v64
    %v66 = vpop.xlane.xlu0 %65
    %v67 = vsel %vm50, %v63, 0.0
    %68 = vadd.xlane.f32.xlu0 %v67
    %v69 = vpop.xlane.xlu0 %68
    %v70 = vmul.f32 %v66, %v57
    %v71 = vmul.f32 %v69, %v57
    %v72 = vadd.f32 %v70, 1e-05
    %v73 = vadd.f32 %v71, 1e-05
    %v74 = vrsqrt.pop %v72
    %v75 = vrsqrt.pop %v73
    %v76 = vmul.f32 %v60, %v74
    %v77 = vmul.f32 %v61, %v75
    %v79 = vlaneseq
    %v80 = vshrl.u32 %v79, 7
    %v81 = vsub.s32 0, %v80
    %v82 = vrot.slane %v48, %v81
    %v84 = vmul.f32 %v76, %v82
    %v85 = vmul.f32 %v77, %v82
    %v87 = vlaneseq
    %v88 = vshrl.u32 %v87, 7
    %v89 = vsub.s32 0, %v88
    %v90 = vrot.slane %v49, %v89
    %v92 = vadd.f32 %v84, %v90
    %v93 = vadd.f32 %v85, %v90
    %v94 = vpack.c.bf16 %v93, %v92
    %v95 = vld [vmem:[%s2] sm:$0xf]
    %v96 = vld [vmem:[%s2 + $0x4] sm:$0xf]
    %v97 = vld [vmem:[%s2 + $0x8] sm:$0xf]
    %v98 = vld [vmem:[%s2 + $0xc] sm:$0xf]
    %v99 = vld [vmem:[%s2 + $0x10] sm:$0xf]
    %v100 = vld [vmem:[%s2 + $0x14] sm:$0xf]
    %v101 = vld [vmem:[%s2 + $0x18] sm:$0xf]
    %v102 = vld [vmem:[%s2 + $0x1c] sm:$0xf]
    %v103 = vld [vmem:[%s2 + $0x20] sm:$0xf]
    %v104 = vld [vmem:[%s2 + $0x24] sm:$0xf]
    %v105 = vld [vmem:[%s2 + $0x28] sm:$0xf]
    %v106 = vld [vmem:[%s2 + $0x2c] sm:$0xf]
    %v107 = vld [vmem:[%s2 + $0x30] sm:$0xf]
    %v108 = vld [vmem:[%s2 + $0x34] sm:$0xf]
    %v109 = vld [vmem:[%s2 + $0x38] sm:$0xf]
    %v110 = vld [vmem:[%s2 + $0x3c] sm:$0xf]
    %v111 = vld [vmem:[%s2 + $0x40] sm:$0xf]
    %v112 = vld [vmem:[%s2 + $0x44] sm:$0xf]
    %v113 = vld [vmem:[%s2 + $0x48] sm:$0xf]
    %v114 = vld [vmem:[%s2 + $0x4c] sm:$0xf]
    %v115 = vld [vmem:[%s2 + $0x50] sm:$0xf]
    %v116 = vld [vmem:[%s2 + $0x54] sm:$0xf]
    %v117 = vld [vmem:[%s2 + $0x58] sm:$0xf]
    %v118 = vld [vmem:[%s2 + $0x5c] sm:$0xf]
    %v119 = vld [vmem:[%s2 + $0x60] sm:$0xf]
    %v120 = vld [vmem:[%s2 + $0x64] sm:$0xf]
    %v121 = vld [vmem:[%s2 + $0x68] sm:$0xf]
    %v122 = vld [vmem:[%s2 + $0x6c] sm:$0xf]
    %v123 = vld [vmem:[%s2 + $0x70] sm:$0xf]
    %v124 = vld [vmem:[%s2 + $0x74] sm:$0xf]
    %v125 = vld [vmem:[%s2 + $0x78] sm:$0xf]
    %v126 = vld [vmem:[%s2 + $0x7c] sm:$0xf]
    %v127 = vld [vmem:[%s2 + $0x80] sm:$0xf]
    %v128 = vld [vmem:[%s2 + $0x84] sm:$0xf]
    %v129 = vld [vmem:[%s2 + $0x88] sm:$0xf]
    %v130 = vld [vmem:[%s2 + $0x8c] sm:$0xf]
    %v131 = vld [vmem:[%s2 + $0x90] sm:$0xf]
    %v132 = vld [vmem:[%s2 + $0x94] sm:$0xf]
    %v133 = vld [vmem:[%s2 + $0x98] sm:$0xf]
    %v134 = vld [vmem:[%s2 + $0x9c] sm:$0xf]
    %v135 = vld [vmem:[%s2 + $0xa0] sm:$0xf]
    %v136 = vld [vmem:[%s2 + $0xa4] sm:$0xf]
    %v137 = vld [vmem:[%s2 + $0xa8] sm:$0xf]
    %v138 = vld [vmem:[%s2 + $0xac] sm:$0xf]
    %v139 = vld [vmem:[%s2 + $0xb0] sm:$0xf]
    %v140 = vld [vmem:[%s2 + $0xb4] sm:$0xf]
    %v141 = vld [vmem:[%s2 + $0xb8] sm:$0xf]
    %v142 = vld [vmem:[%s2 + $0xbc] sm:$0xf]
    %v147 = vunpack.c.l.b16 %v95
    %v148 = vunpack.c.l.b16 %v96
    %v149 = vunpack.c.l.b16 %v97
    %v150 = vunpack.c.l.b16 %v98
    %v151 = vpack.c.b16 %v148, %v147
    %v152 = vpack.c.b16 %v150, %v149
    %v156 = vsel %vm50, %v94, 0
    %158 = vmatprep.subr.bf16.mxu0 0
    %159 = vmatpush1.bf16.msra.mxu0 %v151
    %160 = vmatprep.subr.bf16.mxu0 0
    %161 = vmatpush1.bf16.msra.mxu0 %v152
    %162 = vmatprep.subr.bf16.mxu0 0
    %163 = vmatpush1.bf16.msra.mxu0 0
    %164 = vmatprep.subr.bf16.mxu0 0
    %165 = vmatpush1.bf16.msra.mxu0 0
    %166 = vmatprep.subr.bf16.mxu0 0
    %167 = vmatpush1.bf16.msra.mxu0 0
    %168 = vmatprep.subr.bf16.mxu0 0
    %169 = vmatpush1.bf16.msra.mxu0 0
    %170 = vmatprep.subr.bf16.mxu0 0
    %171 = vmatpush1.bf16.msra.mxu0 0
    %172 = vmatprep.subr.bf16.mxu0 0
    %173 = vmatpush1.bf16.msra.mxu0 0
    %174 = vmatprep.subr.bf16.mxu0 0
    %175 = vmatpush1.bf16.msra.mxu0 0
    %176 = vmatprep.subr.bf16.mxu0 0
    %177 = vmatpush1.bf16.msra.mxu0 0
    %178 = vmatprep.subr.bf16.mxu0 0
    %179 = vmatpush1.bf16.msra.mxu0 0
    %180 = vmatprep.subr.bf16.mxu0 0
    %181 = vmatpush1.bf16.msra.mxu0 0
    %182 = vmatprep.subr.bf16.mxu0 0
    %183 = vmatpush1.bf16.msra.mxu0 0
    %184 = vmatprep.subr.bf16.mxu0 0
    %185 = vmatpush1.bf16.msra.mxu0 0
    %186 = vmatprep.subr.bf16.mxu0 0
    %187 = vmatpush1.bf16.msra.mxu0 0
    %188 = vmatprep.subr.bf16.mxu0 0
    %189 = vmatpush1.bf16.msra.mxu0 0
    %190 = vmatprep.mubr.bf16.mxu0 0
    %191 = vmatmul.mubr.bf16.gmra.mrb[0].mxu0 %v156
    %v192 = vpop.f32.mrb[0].mxu0
    %v193 = vadd.f32 0.0, %v192
    %v194 = vpop.f32.mrb[0].mxu0
    %v195 = vpop.f32.mrb[0].mxu0
    %v196 = vadd.f32 0.0, %v195
    %v197 = vpop.f32.mrb[0].mxu0
    %198 = vdwg.mxu0
    %v203 = vunpack.c.l.b16 %v99
    %v204 = vunpack.c.l.b16 %v100
    %v205 = vunpack.c.l.b16 %v101
    %v206 = vunpack.c.l.b16 %v102
    %v207 = vpack.c.b16 %v204, %v203
    %v208 = vpack.c.b16 %v206, %v205
    %211 = vmatprep.subr.bf16.mxu0 0
    %212 = vmatpush1.bf16.msra.mxu0 %v207
    %213 = vmatprep.subr.bf16.mxu0 0
    %214 = vmatpush1.bf16.msra.mxu0 %v208
    %215 = vmatprep.subr.bf16.mxu0 0
    %216 = vmatpush1.bf16.msra.mxu0 0
    %217 = vmatprep.subr.bf16.mxu0 0
    %218 = vmatpush1.bf16.msra.mxu0 0
    %219 = vmatprep.subr.bf16.mxu0 0
    %220 = vmatpush1.bf16.msra.mxu0 0
    %221 = vmatprep.subr.bf16.mxu0 0
    %222 = vmatpush1.bf16.msra.mxu0 0
    %223 = vmatprep.subr.bf16.mxu0 0
    %224 = vmatpush1.bf16.msra.mxu0 0
    %225 = vmatprep.subr.bf16.mxu0 0
    %226 = vmatpush1.bf16.msra.mxu0 0
    %227 = vmatprep.subr.bf16.mxu0 0
    %228 = vmatpush1.bf16.msra.mxu0 0
    %229 = vmatprep.subr.bf16.mxu0 0
    %230 = vmatpush1.bf16.msra.mxu0 0
    %231 = vmatprep.subr.bf16.mxu0 0
    %232 = vmatpush1.bf16.msra.mxu0 0
    %233 = vmatprep.subr.bf16.mxu0 0
    %234 = vmatpush1.bf16.msra.mxu0 0
    %235 = vmatprep.subr.bf16.mxu0 0
    %236 = vmatpush1.bf16.msra.mxu0 0
    %237 = vmatprep.subr.bf16.mxu0 0
    %238 = vmatpush1.bf16.msra.mxu0 0
    %239 = vmatprep.subr.bf16.mxu0 0
    %240 = vmatpush1.bf16.msra.mxu0 0
    %241 = vmatprep.subr.bf16.mxu0 0
    %242 = vmatpush1.bf16.msra.mxu0 0
    %243 = vmatprep.mubr.bf16.mxu0 0
    %244 = vmatmul.mubr.bf16.gmra.mrb[0].mxu0 %v156
    %v245 = vpop.f32.mrb[0].mxu0
    %v246 = vadd.f32 0.0, %v245
    %v247 = vpop.f32.mrb[0].mxu0
    %v248 = vpop.f32.mrb[0].mxu0
    %v249 = vadd.f32 0.0, %v248
    %v250 = vpop.f32.mrb[0].mxu0
    %251 = vdwg.mxu0
    %v256 = vunpack.c.l.b16 %v103
    %v257 = vunpack.c.l.b16 %v104
    %v258 = vunpack.c.l.b16 %v105
    %v259 = vunpack.c.l.b16 %v106
    %v260 = vpack.c.b16 %v257, %v256
    %v261 = vpack.c.b16 %v259, %v258
    %264 = vmatprep.subr.bf16.mxu0 0
    %265 = vmatpush1.bf16.msra.mxu0 %v260
    %266 = vmatprep.subr.bf16.mxu0 0
    %267 = vmatpush1.bf16.msra.mxu0 %v261
    %268 = vmatprep.subr.bf16.mxu0 0
    %269 = vmatpush1.bf16.msra.mxu0 0
    %270 = vmatprep.subr.bf16.mxu0 0
    %271 = vmatpush1.bf16.msra.mxu0 0
    %272 = vmatprep.subr.bf16.mxu0 0
    %273 = vmatpush1.bf16.msra.mxu0 0
    %274 = vmatprep.subr.bf16.mxu0 0
    %275 = vmatpush1.bf16.msra.mxu0 0
    %276 = vmatprep.subr.bf16.mxu0 0
    %277 = vmatpush1.bf16.msra.mxu0 0
    %278 = vmatprep.subr.bf16.mxu0 0
    %279 = vmatpush1.bf16.msra.mxu0 0
    %280 = vmatprep.subr.bf16.mxu0 0
    %281 = vmatpush1.bf16.msra.mxu0 0
    %282 = vmatprep.subr.bf16.mxu0 0
    %283 = vmatpush1.bf16.msra.mxu0 0
    %284 = vmatprep.subr.bf16.mxu0 0
    %285 = vmatpush1.bf16.msra.mxu0 0
    %286 = vmatprep.subr.bf16.mxu0 0
    %287 = vmatpush1.bf16.msra.mxu0 0
    %288 = vmatprep.subr.bf16.mxu0 0
    %289 = vmatpush1.bf16.msra.mxu0 0
    %290 = vmatprep.subr.bf16.mxu0 0
    %291 = vmatpush1.bf16.msra.mxu0 0
    %292 = vmatprep.subr.bf16.mxu0 0
    %293 = vmatpush1.bf16.msra.mxu0 0
    %294 = vmatprep.subr.bf16.mxu0 0
    %295 = vmatpush1.bf16.msra.mxu0 0
    %296 = vmatprep.mubr.bf16.mxu0 0
    %297 = vmatmul.mubr.bf16.gmra.mrb[0].mxu0 %v156
    %v298 = vpop.f32.mrb[0].mxu0
    %v299 = vadd.f32 0.0, %v298
    %v300 = vpop.f32.mrb[0].mxu0
    %v301 = vpop.f32.mrb[0].mxu0
    %v302 = vadd.f32 0.0, %v301
    %v303 = vpop.f32.mrb[0].mxu0
    %304 = vdwg.mxu0
    %v309 = vunpack.c.l.b16 %v107
    %v310 = vunpack.c.l.b16 %v108
    %v311 = vunpack.c.l.b16 %v109
    %v312 = vunpack.c.l.b16 %v110
    %v313 = vpack.c.b16 %v310, %v309
    %v314 = vpack.c.b16 %v312, %v311
    %317 = vmatprep.subr.bf16.mxu0 0
    %318 = vmatpush1.bf16.msra.mxu0 %v313
    %319 = vmatprep.subr.bf16.mxu0 0
    %320 = vmatpush1.bf16.msra.mxu0 %v314
    %321 = vmatprep.subr.bf16.mxu0 0
    %322 = vmatpush1.bf16.msra.mxu0 0
    %323 = vmatprep.subr.bf16.mxu0 0
    %324 = vmatpush1.bf16.msra.mxu0 0
    %325 = vmatprep.subr.bf16.mxu0 0
    %326 = vmatpush1.bf16.msra.mxu0 0
    %327 = vmatprep.subr.bf16.mxu0 0
    %328 = vmatpush1.bf16.msra.mxu0 0
    %329 = vmatprep.subr.bf16.mxu0 0
    %330 = vmatpush1.bf16.msra.mxu0 0
    %331 = vmatprep.subr.bf16.mxu0 0
    %332 = vmatpush1.bf16.msra.mxu0 0
    %333 = vmatprep.subr.bf16.mxu0 0
    %334 = vmatpush1.bf16.msra.mxu0 0
    %335 = vmatprep.subr.bf16.mxu0 0
    %336 = vmatpush1.bf16.msra.mxu0 0
    %337 = vmatprep.subr.bf16.mxu0 0
    %338 = vmatpush1.bf16.msra.mxu0 0
    %339 = vmatprep.subr.bf16.mxu0 0
    %340 = vmatpush1.bf16.msra.mxu0 0
    %341 = vmatprep.subr.bf16.mxu0 0
    %342 = vmatpush1.bf16.msra.mxu0 0
    %343 = vmatprep.subr.bf16.mxu0 0
    %344 = vmatpush1.bf16.msra.mxu0 0
    %345 = vmatprep.subr.bf16.mxu0 0
    %346 = vmatpush1.bf16.msra.mxu0 0
    %347 = vmatprep.subr.bf16.mxu0 0
    %348 = vmatpush1.bf16.msra.mxu0 0
    %349 = vmatprep.mubr.bf16.mxu0 0
    %350 = vmatmul.mubr.bf16.gmra.mrb[0].mxu0 %v156
    %v351 = vpop.f32.mrb[0].mxu0
    %v352 = vadd.f32 0.0, %v351
    %v353 = vpop.f32.mrb[0].mxu0
    %v354 = vpop.f32.mrb[0].mxu0
    %v355 = vadd.f32 0.0, %v354
    %v356 = vpop.f32.mrb[0].mxu0
    %357 = vdwg.mxu0
    %v362 = vunpack.c.l.b16 %v111
    %v363 = vunpack.c.l.b16 %v112
    %v364 = vunpack.c.l.b16 %v113
    %v365 = vunpack.c.l.b16 %v114
    %v366 = vpack.c.b16 %v363, %v362
    %v367 = vpack.c.b16 %v365, %v364
    %370 = vmatprep.subr.bf16.mxu0 0
    %371 = vmatpush1.bf16.msra.mxu0 %v366
    %372 = vmatprep.subr.bf16.mxu0 0
    %373 = vmatpush1.bf16.msra.mxu0 %v367
    %374 = vmatprep.subr.bf16.mxu0 0
    %375 = vmatpush1.bf16.msra.mxu0 0
    %376 = vmatprep.subr.bf16.mxu0 0
    %377 = vmatpush1.bf16.msra.mxu0 0
    %378 = vmatprep.subr.bf16.mxu0 0
    %379 = vmatpush1.bf16.msra.mxu0 0
    %380 = vmatprep.subr.bf16.mxu0 0
    %381 = vmatpush1.bf16.msra.mxu0 0
    %382 = vmatprep.subr.bf16.mxu0 0
    %383 = vmatpush1.bf16.msra.mxu0 0
    %384 = vmatprep.subr.bf16.mxu0 0
    %385 = vmatpush1.bf16.msra.mxu0 0
    %386 = vmatprep.subr.bf16.mxu0 0
    %387 = vmatpush1.bf16.msra.mxu0 0
    %388 = vmatprep.subr.bf16.mxu0 0
    %389 = vmatpush1.bf16.msra.mxu0 0
    %390 = vmatprep.subr.bf16.mxu0 0
    %391 = vmatpush1.bf16.msra.mxu0 0
    %392 = vmatprep.subr.bf16.mxu0 0
    %393 = vmatpush1.bf16.msra.mxu0 0
    %394 = vmatprep.subr.bf16.mxu0 0
    %395 = vmatpush1.bf16.msra.mxu0 0
    %396 = vmatprep.subr.bf16.mxu0 0
    %397 = vmatpush1.bf16.msra.mxu0 0
    %398 = vmatprep.subr.bf16.mxu0 0
    %399 = vmatpush1.bf16.msra.mxu0 0
    %400 = vmatprep.subr.bf16.mxu0 0
    %401 = vmatpush1.bf16.msra.mxu0 0
    %402 = vmatprep.mubr.bf16.mxu0 0
    %403 = vmatmul.mubr.bf16.gmra.mrb[0].mxu0 %v156
    %v404 = vpop.f32.mrb[0].mxu0
    %v405 = vadd.f32 0.0, %v404
    %v406 = vpop.f32.mrb[0].mxu0
    %v407 = vpop.f32.mrb[0].mxu0
    %v408 = vadd.f32 0.0, %v407
    %v409 = vpop.f32.mrb[0].mxu0
    %410 = vdwg.mxu0
    %v415 = vunpack.c.l.b16 %v115
    %v416 = vunpack.c.l.b16 %v116
    %v417 = vunpack.c.l.b16 %v117
    %v418 = vunpack.c.l.b16 %v118
    %v419 = vpack.c.b16 %v416, %v415
    %v420 = vpack.c.b16 %v418, %v417
    %423 = vmatprep.subr.bf16.mxu0 0
    %424 = vmatpush1.bf16.msra.mxu0 %v419
    %425 = vmatprep.subr.bf16.mxu0 0
    %426 = vmatpush1.bf16.msra.mxu0 %v420
    %427 = vmatprep.subr.bf16.mxu0 0
    %428 = vmatpush1.bf16.msra.mxu0 0
    %429 = vmatprep.subr.bf16.mxu0 0
    %430 = vmatpush1.bf16.msra.mxu0 0
    %431 = vmatprep.subr.bf16.mxu0 0
    %432 = vmatpush1.bf16.msra.mxu0 0
    %433 = vmatprep.subr.bf16.mxu0 0
    %434 = vmatpush1.bf16.msra.mxu0 0
    %435 = vmatprep.subr.bf16.mxu0 0
    %436 = vmatpush1.bf16.msra.mxu0 0
    %437 = vmatprep.subr.bf16.mxu0 0
    %438 = vmatpush1.bf16.msra.mxu0 0
    %439 = vmatprep.subr.bf16.mxu0 0
    %440 = vmatpush1.bf16.msra.mxu0 0
    %441 = vmatprep.subr.bf16.mxu0 0
    %442 = vmatpush1.bf16.msra.mxu0 0
    %443 = vmatprep.subr.bf16.mxu0 0
    %444 = vmatpush1.bf16.msra.mxu0 0
    %445 = vmatprep.subr.bf16.mxu0 0
    %446 = vmatpush1.bf16.msra.mxu0 0
    %447 = vmatprep.subr.bf16.mxu0 0
    %448 = vmatpush1.bf16.msra.mxu0 0
    %449 = vmatprep.subr.bf16.mxu0 0
    %450 = vmatpush1.bf16.msra.mxu0 0
    %451 = vmatprep.subr.bf16.mxu0 0
    %452 = vmatpush1.bf16.msra.mxu0 0
    %453 = vmatprep.subr.bf16.mxu0 0
    %454 = vmatpush1.bf16.msra.mxu0 0
    %455 = vmatprep.mubr.bf16.mxu0 0
    %456 = vmatmul.mubr.bf16.gmra.mrb[0].mxu0 %v156
    %v457 = vpop.f32.mrb[0].mxu0
    %v458 = vadd.f32 0.0, %v457
    %v459 = vpop.f32.mrb[0].mxu0
    %v460 = vpop.f32.mrb[0].mxu0
    %v461 = vadd.f32 0.0, %v460
    %v462 = vpop.f32.mrb[0].mxu0
    %463 = vdwg.mxu0
    %v468 = vunpack.c.l.b16 %v119
    %v469 = vunpack.c.l.b16 %v120
    %v470 = vunpack.c.l.b16 %v121
    %v471 = vunpack.c.l.b16 %v122
    %v472 = vpack.c.b16 %v469, %v468
    %v473 = vpack.c.b16 %v471, %v470
    %476 = vmatprep.subr.bf16.mxu0 0
    %477 = vmatpush1.bf16.msra.mxu0 %v472
    %478 = vmatprep.subr.bf16.mxu0 0
    %479 = vmatpush1.bf16.msra.mxu0 %v473
    %480 = vmatprep.subr.bf16.mxu0 0
    %481 = vmatpush1.bf16.msra.mxu0 0
    %482 = vmatprep.subr.bf16.mxu0 0
    %483 = vmatpush1.bf16.msra.mxu0 0
    %484 = vmatprep.subr.bf16.mxu0 0
    %485 = vmatpush1.bf16.msra.mxu0 0
    %486 = vmatprep.subr.bf16.mxu0 0
    %487 = vmatpush1.bf16.msra.mxu0 0
    %488 = vmatprep.subr.bf16.mxu0 0
    %489 = vmatpush1.bf16.msra.mxu0 0
    %490 = vmatprep.subr.bf16.mxu0 0
    %491 = vmatpush1.bf16.msra.mxu0 0
    %492 = vmatprep.subr.bf16.mxu0 0
    %493 = vmatpush1.bf16.msra.mxu0 0
    %494 = vmatprep.subr.bf16.mxu0 0
    %495 = vmatpush1.bf16.msra.mxu0 0
    %496 = vmatprep.subr.bf16.mxu0 0
    %497 = vmatpush1.bf16.msra.mxu0 0
    %498 = vmatprep.subr.bf16.mxu0 0
    %499 = vmatpush1.bf16.msra.mxu0 0
    %500 = vmatprep.subr.bf16.mxu0 0
    %501 = vmatpush1.bf16.msra.mxu0 0
    %502 = vmatprep.subr.bf16.mxu0 0
    %503 = vmatpush1.bf16.msra.mxu0 0
    %504 = vmatprep.subr.bf16.mxu0 0
    %505 = vmatpush1.bf16.msra.mxu0 0
    %506 = vmatprep.subr.bf16.mxu0 0
    %507 = vmatpush1.bf16.msra.mxu0 0
    %508 = vmatprep.mubr.bf16.mxu0 0
    %509 = vmatmul.mubr.bf16.gmra.mrb[0].mxu0 %v156
    %v510 = vpop.f32.mrb[0].mxu0
    %v511 = vadd.f32 0.0, %v510
    %v512 = vpop.f32.mrb[0].mxu0
    %v513 = vpop.f32.mrb[0].mxu0
    %v514 = vadd.f32 0.0, %v513
    %v515 = vpop.f32.mrb[0].mxu0
    %516 = vdwg.mxu0
    %v521 = vunpack.c.l.b16 %v123
    %v522 = vunpack.c.l.b16 %v124
    %v523 = vunpack.c.l.b16 %v125
    %v524 = vunpack.c.l.b16 %v126
    %v525 = vpack.c.b16 %v522, %v521
    %v526 = vpack.c.b16 %v524, %v523
    %529 = vmatprep.subr.bf16.mxu0 0
    %530 = vmatpush1.bf16.msra.mxu0 %v525
    %531 = vmatprep.subr.bf16.mxu0 0
    %532 = vmatpush1.bf16.msra.mxu0 %v526
    %533 = vmatprep.subr.bf16.mxu0 0
    %534 = vmatpush1.bf16.msra.mxu0 0
    %535 = vmatprep.subr.bf16.mxu0 0
    %536 = vmatpush1.bf16.msra.mxu0 0
    %537 = vmatprep.subr.bf16.mxu0 0
    %538 = vmatpush1.bf16.msra.mxu0 0
    %539 = vmatprep.subr.bf16.mxu0 0
    %540 = vmatpush1.bf16.msra.mxu0 0
    %541 = vmatprep.subr.bf16.mxu0 0
    %542 = vmatpush1.bf16.msra.mxu0 0
    %543 = vmatprep.subr.bf16.mxu0 0
    %544 = vmatpush1.bf16.msra.mxu0 0
    %545 = vmatprep.subr.bf16.mxu0 0
    %546 = vmatpush1.bf16.msra.mxu0 0
    %547 = vmatprep.subr.bf16.mxu0 0
    %548 = vmatpush1.bf16.msra.mxu0 0
    %549 = vmatprep.subr.bf16.mxu0 0
    %550 = vmatpush1.bf16.msra.mxu0 0
    %551 = vmatprep.subr.bf16.mxu0 0
    %552 = vmatpush1.bf16.msra.mxu0 0
    %553 = vmatprep.subr.bf16.mxu0 0
    %554 = vmatpush1.bf16.msra.mxu0 0
    %555 = vmatprep.subr.bf16.mxu0 0
    %556 = vmatpush1.bf16.msra.mxu0 0
    %557 = vmatprep.subr.bf16.mxu0 0
    %558 = vmatpush1.bf16.msra.mxu0 0
    %559 = vmatprep.subr.bf16.mxu0 0
    %560 = vmatpush1.bf16.msra.mxu0 0
    %561 = vmatprep.mubr.bf16.mxu0 0
    %562 = vmatmul.mubr.bf16.gmra.mrb[0].mxu0 %v156
    %v563 = vpop.f32.mrb[0].mxu0
    %v564 = vadd.f32 0.0, %v563
    %v565 = vpop.f32.mrb[0].mxu0
    %v566 = vpop.f32.mrb[0].mxu0
    %v567 = vadd.f32 0.0, %v566
    %v568 = vpop.f32.mrb[0].mxu0
    %569 = vdwg.mxu0
    %v574 = vunpack.c.l.b16 %v127
    %v575 = vunpack.c.l.b16 %v128
    %v576 = vunpack.c.l.b16 %v129
    %v577 = vunpack.c.l.b16 %v130
    %v578 = vpack.c.b16 %v575, %v574
    %v579 = vpack.c.b16 %v577, %v576
    %582 = vmatprep.subr.bf16.mxu0 0
    %583 = vmatpush1.bf16.msra.mxu0 %v578
    %584 = vmatprep.subr.bf16.mxu0 0
    %585 = vmatpush1.bf16.msra.mxu0 %v579
    %586 = vmatprep.subr.bf16.mxu0 0
    %587 = vmatpush1.bf16.msra.mxu0 0
    %588 = vmatprep.subr.bf16.mxu0 0
    %589 = vmatpush1.bf16.msra.mxu0 0
    %590 = vmatprep.subr.bf16.mxu0 0
    %591 = vmatpush1.bf16.msra.mxu0 0
    %592 = vmatprep.subr.bf16.mxu0 0
    %593 = vmatpush1.bf16.msra.mxu0 0
    %594 = vmatprep.subr.bf16.mxu0 0
    %595 = vmatpush1.bf16.msra.mxu0 0
    %596 = vmatprep.subr.bf16.mxu0 0
    %597 = vmatpush1.bf16.msra.mxu0 0
    %598 = vmatprep.subr.bf16.mxu0 0
    %599 = vmatpush1.bf16.msra.mxu0 0
    %600 = vmatprep.subr.bf16.mxu0 0
    %601 = vmatpush1.bf16.msra.mxu0 0
    %602 = vmatprep.subr.bf16.mxu0 0
    %603 = vmatpush1.bf16.msra.mxu0 0
    %604 = vmatprep.subr.bf16.mxu0 0
    %605 = vmatpush1.bf16.msra.mxu0 0
    %606 = vmatprep.subr.bf16.mxu0 0
    %607 = vmatpush1.bf16.msra.mxu0 0
    %608 = vmatprep.subr.bf16.mxu0 0
    %609 = vmatpush1.bf16.msra.mxu0 0
    %610 = vmatprep.subr.bf16.mxu0 0
    %611 = vmatpush1.bf16.msra.mxu0 0
    %612 = vmatprep.subr.bf16.mxu0 0
    %613 = vmatpush1.bf16.msra.mxu0 0
    %614 = vmatprep.mubr.bf16.mxu0 0
    %615 = vmatmul.mubr.bf16.gmra.mrb[0].mxu0 %v156
    %v616 = vpop.f32.mrb[0].mxu0
    %v617 = vadd.f32 0.0, %v616
    %v618 = vpop.f32.mrb[0].mxu0
    %v619 = vpop.f32.mrb[0].mxu0
    %v620 = vadd.f32 0.0, %v619
    %v621 = vpop.f32.mrb[0].mxu0
    %622 = vdwg.mxu0
    %v627 = vunpack.c.l.b16 %v131
    %v628 = vunpack.c.l.b16 %v132
    %v629 = vunpack.c.l.b16 %v133
    %v630 = vunpack.c.l.b16 %v134
    %v631 = vpack.c.b16 %v628, %v627
    %v632 = vpack.c.b16 %v630, %v629
    %635 = vmatprep.subr.bf16.mxu0 0
    %636 = vmatpush1.bf16.msra.mxu0 %v631
    %637 = vmatprep.subr.bf16.mxu0 0
    %638 = vmatpush1.bf16.msra.mxu0 %v632
    %639 = vmatprep.subr.bf16.mxu0 0
    %640 = vmatpush1.bf16.msra.mxu0 0
    %641 = vmatprep.subr.bf16.mxu0 0
    %642 = vmatpush1.bf16.msra.mxu0 0
    %643 = vmatprep.subr.bf16.mxu0 0
    %644 = vmatpush1.bf16.msra.mxu0 0
    %645 = vmatprep.subr.bf16.mxu0 0
    %646 = vmatpush1.bf16.msra.mxu0 0
    %647 = vmatprep.subr.bf16.mxu0 0
    %648 = vmatpush1.bf16.msra.mxu0 0
    %649 = vmatprep.subr.bf16.mxu0 0
    %650 = vmatpush1.bf16.msra.mxu0 0
    %651 = vmatprep.subr.bf16.mxu0 0
    %652 = vmatpush1.bf16.msra.mxu0 0
    %653 = vmatprep.subr.bf16.mxu0 0
    %654 = vmatpush1.bf16.msra.mxu0 0
    %655 = vmatprep.subr.bf16.mxu0 0
    %656 = vmatpush1.bf16.msra.mxu0 0
    %657 = vmatprep.subr.bf16.mxu0 0
    %658 = vmatpush1.bf16.msra.mxu0 0
    %659 = vmatprep.subr.bf16.mxu0 0
    %660 = vmatpush1.bf16.msra.mxu0 0
    %661 = vmatprep.subr.bf16.mxu0 0
    %662 = vmatpush1.bf16.msra.mxu0 0
    %663 = vmatprep.subr.bf16.mxu0 0
    %664 = vmatpush1.bf16.msra.mxu0 0
    %665 = vmatprep.subr.bf16.mxu0 0
    %666 = vmatpush1.bf16.msra.mxu0 0
    %667 = vmatprep.mubr.bf16.mxu0 0
    %668 = vmatmul.mubr.bf16.gmra.mrb[0].mxu0 %v156
    %v669 = vpop.f32.mrb[0].mxu0
    %v670 = vadd.f32 0.0, %v669
    %v671 = vpop.f32.mrb[0].mxu0
    %v672 = vpop.f32.mrb[0].mxu0
    %v673 = vadd.f32 0.0, %v672
    %v674 = vpop.f32.mrb[0].mxu0
    %675 = vdwg.mxu0
    %v680 = vunpack.c.l.b16 %v135
    %v681 = vunpack.c.l.b16 %v136
    %v682 = vunpack.c.l.b16 %v137
    %v683 = vunpack.c.l.b16 %v138
    %v684 = vpack.c.b16 %v681, %v680
    %v685 = vpack.c.b16 %v683, %v682
    %688 = vmatprep.subr.bf16.mxu0 0
    %689 = vmatpush1.bf16.msra.mxu0 %v684
    %690 = vmatprep.subr.bf16.mxu0 0
    %691 = vmatpush1.bf16.msra.mxu0 %v685
    %692 = vmatprep.subr.bf16.mxu0 0
    %693 = vmatpush1.bf16.msra.mxu0 0
    %694 = vmatprep.subr.bf16.mxu0 0
    %695 = vmatpush1.bf16.msra.mxu0 0
    %696 = vmatprep.subr.bf16.mxu0 0
    %697 = vmatpush1.bf16.msra.mxu0 0
    %698 = vmatprep.subr.bf16.mxu0 0
    %699 = vmatpush1.bf16.msra.mxu0 0
    %700 = vmatprep.subr.bf16.mxu0 0
    %701 = vmatpush1.bf16.msra.mxu0 0
    %702 = vmatprep.subr.bf16.mxu0 0
    %703 = vmatpush1.bf16.msra.mxu0 0
    %704 = vmatprep.subr.bf16.mxu0 0
    %705 = vmatpush1.bf16.msra.mxu0 0
    %706 = vmatprep.subr.bf16.mxu0 0
    %707 = vmatpush1.bf16.msra.mxu0 0
    %708 = vmatprep.subr.bf16.mxu0 0
    %709 = vmatpush1.bf16.msra.mxu0 0
    %710 = vmatprep.subr.bf16.mxu0 0
    %711 = vmatpush1.bf16.msra.mxu0 0
    %712 = vmatprep.subr.bf16.mxu0 0
    %713 = vmatpush1.bf16.msra.mxu0 0
    %714 = vmatprep.subr.bf16.mxu0 0
    %715 = vmatpush1.bf16.msra.mxu0 0
    %716 = vmatprep.subr.bf16.mxu0 0
    %717 = vmatpush1.bf16.msra.mxu0 0
    %718 = vmatprep.subr.bf16.mxu0 0
    %719 = vmatpush1.bf16.msra.mxu0 0
    %720 = vmatprep.mubr.bf16.mxu0 0
    %721 = vmatmul.mubr.bf16.gmra.mrb[0].mxu0 %v156
    %v722 = vpop.f32.mrb[0].mxu0
    %v723 = vadd.f32 0.0, %v722
    %v724 = vpop.f32.mrb[0].mxu0
    %v725 = vpop.f32.mrb[0].mxu0
    %v726 = vadd.f32 0.0, %v725
    %v727 = vpop.f32.mrb[0].mxu0
    %728 = vdwg.mxu0
    %v733 = vunpack.c.l.b16 %v139
    %v734 = vunpack.c.l.b16 %v140
    %v735 = vunpack.c.l.b16 %v141
    %v736 = vunpack.c.l.b16 %v142
    %v737 = vpack.c.b16 %v734, %v733
    %v738 = vpack.c.b16 %v736, %v735
    %741 = vmatprep.subr.bf16.mxu0 0
    %742 = vmatpush1.bf16.msra.mxu0 %v737
    %743 = vmatprep.subr.bf16.mxu0 0
    %744 = vmatpush1.bf16.msra.mxu0 %v738
    %745 = vmatprep.subr.bf16.mxu0 0
    %746 = vmatpush1.bf16.msra.mxu0 0
    %747 = vmatprep.subr.bf16.mxu0 0
    %748 = vmatpush1.bf16.msra.mxu0 0
    %749 = vmatprep.subr.bf16.mxu0 0
    %750 = vmatpush1.bf16.msra.mxu0 0
    %751 = vmatprep.subr.bf16.mxu0 0
    %752 = vmatpush1.bf16.msra.mxu0 0
    %753 = vmatprep.subr.bf16.mxu0 0
    %754 = vmatpush1.bf16.msra.mxu0 0
    %755 = vmatprep.subr.bf16.mxu0 0
    %756 = vmatpush1.bf16.msra.mxu0 0
    %757 = vmatprep.subr.bf16.mxu0 0
    %758 = vmatpush1.bf16.msra.mxu0 0
    %759 = vmatprep.subr.bf16.mxu0 0
    %760 = vmatpush1.bf16.msra.mxu0 0
    %761 = vmatprep.subr.bf16.mxu0 0
    %762 = vmatpush1.bf16.msra.mxu0 0
    %763 = vmatprep.subr.bf16.mxu0 0
    %764 = vmatpush1.bf16.msra.mxu0 0
    %765 = vmatprep.subr.bf16.mxu0 0
    %766 = vmatpush1.bf16.msra.mxu0 0
    %767 = vmatprep.subr.bf16.mxu0 0
    %768 = vmatpush1.bf16.msra.mxu0 0
    %769 = vmatprep.subr.bf16.mxu0 0
    %770 = vmatpush1.bf16.msra.mxu0 0
    %771 = vmatprep.subr.bf16.mxu0 0
    %772 = vmatpush1.bf16.msra.mxu0 0
    %773 = vmatprep.mubr.bf16.mxu0 0
    %774 = vmatmul.mubr.bf16.gmra.mrb[0].mxu0 %v156
    %v775 = vpop.f32.mrb[0].mxu0
    %v776 = vadd.f32 0.0, %v775
    %v777 = vpop.f32.mrb[0].mxu0
    %v778 = vpop.f32.mrb[0].mxu0
    %v779 = vadd.f32 0.0, %v778
    %v780 = vpop.f32.mrb[0].mxu0
    %781 = vdwg.mxu0
    %v782 = vpack.c.bf16 %v196, %v193
    %v783 = vpack.c.bf16 %v249, %v246
    %v784 = vpack.c.bf16 %v302, %v299
    %v785 = vpack.c.bf16 %v355, %v352
    %v786 = vpack.c.bf16 %v408, %v405
    %v787 = vpack.c.bf16 %v461, %v458
    %v788 = vpack.c.bf16 %v514, %v511
    %v789 = vpack.c.bf16 %v567, %v564
    %v790 = vpack.c.bf16 %v620, %v617
    %v791 = vpack.c.bf16 %v673, %v670
    %v792 = vpack.c.bf16 %v726, %v723
    %v793 = vpack.c.bf16 %v779, %v776
    %v794 = vld [vmem:[%s1] sm:$0xff]
    %v795 = vld [vmem:[%s1 + $0x8] sm:$0xff]
    %vm796 = vcmask 64512
    %v798 = vsel %vm796, %v782, 0
    %v801 = vsel %vm796, %v786, 0
    %803 = vmatprep.subr.bf16.mxu0 0
    %804 = vmatpush1.bf16.xpose.msra.mxu0 %v801
    %805 = vmatprep.subr.bf16.mxu0 0
    %806 = vmatpush1.bf16.xpose.msra.mxu0 0
    %807 = vmatprep.subr.bf16.mxu0 0
    %808 = vmatpush1.bf16.xpose.msra.mxu0 0
    %809 = vmatprep.subr.bf16.mxu0 0
    %810 = vmatpush1.bf16.xpose.msra.mxu0 0
    %811 = vmatprep.subr.bf16.mxu0 0
    %812 = vmatpush1.bf16.xpose.msra.mxu0 0
    %813 = vmatprep.subr.bf16.mxu0 0
    %814 = vmatpush1.bf16.xpose.msra.mxu0 0
    %815 = vmatprep.subr.bf16.mxu0 0
    %816 = vmatpush1.bf16.xpose.msra.mxu0 0
    %817 = vmatprep.subr.bf16.mxu0 0
    %818 = vmatpush1.bf16.xpose.msra.mxu0 0
    %819 = vmatprep.subr.bf16.mxu0 0
    %820 = vmatpush1.bf16.xpose.msra.mxu0 0
    %821 = vmatprep.subr.bf16.mxu0 0
    %822 = vmatpush1.bf16.xpose.msra.mxu0 0
    %823 = vmatprep.subr.bf16.mxu0 0
    %824 = vmatpush1.bf16.xpose.msra.mxu0 0
    %825 = vmatprep.subr.bf16.mxu0 0
    %826 = vmatpush1.bf16.xpose.msra.mxu0 0
    %827 = vmatprep.subr.bf16.mxu0 0
    %828 = vmatpush1.bf16.xpose.msra.mxu0 0
    %829 = vmatprep.subr.bf16.mxu0 0
    %830 = vmatpush1.bf16.xpose.msra.mxu0 0
    %831 = vmatprep.subr.bf16.mxu0 0
    %832 = vmatpush1.bf16.xpose.msra.mxu0 0
    %833 = vmatprep.subr.bf16.mxu0 0
    %834 = vmatpush1.bf16.xpose.msra.mxu0 0
    %835 = vmatprep.mubr.bf16.mxu0 0
    %836 = vmatmul.mubr.bf16.gmra.mrb[0].mxu0 %v798
    %v837 = vpop.f32.mrb[0].mxu0
    %v838 = vadd.f32 %v794, %v837
    %v839 = vpop.f32.mrb[0].mxu0
    %v840 = vpop.f32.mrb[0].mxu0
    %v841 = vadd.f32 %v795, %v840
    %v842 = vpop.f32.mrb[0].mxu0
    %843 = vdwg.mxu0
    %v845 = vsel %vm796, %v783, 0
    %v848 = vsel %vm796, %v787, 0
    %850 = vmatprep.subr.bf16.mxu0 0
    %851 = vmatpush1.bf16.xpose.msra.mxu0 %v848
    %852 = vmatprep.subr.bf16.mxu0 0
    %853 = vmatpush1.bf16.xpose.msra.mxu0 0
    %854 = vmatprep.subr.bf16.mxu0 0
    %855 = vmatpush1.bf16.xpose.msra.mxu0 0
    %856 = vmatprep.subr.bf16.mxu0 0
    %857 = vmatpush1.bf16.xpose.msra.mxu0 0
    %858 = vmatprep.subr.bf16.mxu0 0
    %859 = vmatpush1.bf16.xpose.msra.mxu0 0
    %860 = vmatprep.subr.bf16.mxu0 0
    %861 = vmatpush1.bf16.xpose.msra.mxu0 0
    %862 = vmatprep.subr.bf16.mxu0 0
    %863 = vmatpush1.bf16.xpose.msra.mxu0 0
    %864 = vmatprep.subr.bf16.mxu0 0
    %865 = vmatpush1.bf16.xpose.msra.mxu0 0
    %866 = vmatprep.subr.bf16.mxu0 0
    %867 = vmatpush1.bf16.xpose.msra.mxu0 0
    %868 = vmatprep.subr.bf16.mxu0 0
    %869 = vmatpush1.bf16.xpose.msra.mxu0 0
    %870 = vmatprep.subr.bf16.mxu0 0
    %871 = vmatpush1.bf16.xpose.msra.mxu0 0
    %872 = vmatprep.subr.bf16.mxu0 0
    %873 = vmatpush1.bf16.xpose.msra.mxu0 0
    %874 = vmatprep.subr.bf16.mxu0 0
    %875 = vmatpush1.bf16.xpose.msra.mxu0 0
    %876 = vmatprep.subr.bf16.mxu0 0
    %877 = vmatpush1.bf16.xpose.msra.mxu0 0
    %878 = vmatprep.subr.bf16.mxu0 0
    %879 = vmatpush1.bf16.xpose.msra.mxu0 0
    %880 = vmatprep.subr.bf16.mxu0 0
    %881 = vmatpush1.bf16.xpose.msra.mxu0 0
    %882 = vmatprep.mubr.bf16.mxu0 0
    %883 = vmatmul.mubr.bf16.gmra.mrb[0].mxu0 %v845
    %v884 = vpop.f32.mrb[0].mxu0
    %v885 = vadd.f32 %v794, %v884
    %v886 = vpop.f32.mrb[0].mxu0
    %v887 = vpop.f32.mrb[0].mxu0
    %v888 = vadd.f32 %v795, %v887
    %v889 = vpop.f32.mrb[0].mxu0
    %890 = vdwg.mxu0
    %v892 = vsel %vm796, %v784, 0
    %v895 = vsel %vm796, %v788, 0
    %897 = vmatprep.subr.bf16.mxu0 0
    %898 = vmatpush1.bf16.xpose.msra.mxu0 %v895
    %899 = vmatprep.subr.bf16.mxu0 0
    %900 = vmatpush1.bf16.xpose.msra.mxu0 0
    %901 = vmatprep.subr.bf16.mxu0 0
    %902 = vmatpush1.bf16.xpose.msra.mxu0 0
    %903 = vmatprep.subr.bf16.mxu0 0
    %904 = vmatpush1.bf16.xpose.msra.mxu0 0
    %905 = vmatprep.subr.bf16.mxu0 0
    %906 = vmatpush1.bf16.xpose.msra.mxu0 0
    %907 = vmatprep.subr.bf16.mxu0 0
    %908 = vmatpush1.bf16.xpose.msra.mxu0 0
    %909 = vmatprep.subr.bf16.mxu0 0
    %910 = vmatpush1.bf16.xpose.msra.mxu0 0
    %911 = vmatprep.subr.bf16.mxu0 0
    %912 = vmatpush1.bf16.xpose.msra.mxu0 0
    %913 = vmatprep.subr.bf16.mxu0 0
    %914 = vmatpush1.bf16.xpose.msra.mxu0 0
    %915 = vmatprep.subr.bf16.mxu0 0
    %916 = vmatpush1.bf16.xpose.msra.mxu0 0
    %917 = vmatprep.subr.bf16.mxu0 0
    %918 = vmatpush1.bf16.xpose.msra.mxu0 0
    %919 = vmatprep.subr.bf16.mxu0 0
    %920 = vmatpush1.bf16.xpose.msra.mxu0 0
    %921 = vmatprep.subr.bf16.mxu0 0
    %922 = vmatpush1.bf16.xpose.msra.mxu0 0
    %923 = vmatprep.subr.bf16.mxu0 0
    %924 = vmatpush1.bf16.xpose.msra.mxu0 0
    %925 = vmatprep.subr.bf16.mxu0 0
    %926 = vmatpush1.bf16.xpose.msra.mxu0 0
    %927 = vmatprep.subr.bf16.mxu0 0
    %928 = vmatpush1.bf16.xpose.msra.mxu0 0
    %929 = vmatprep.mubr.bf16.mxu0 0
    %930 = vmatmul.mubr.bf16.gmra.mrb[0].mxu0 %v892
    %v931 = vpop.f32.mrb[0].mxu0
    %v932 = vadd.f32 %v794, %v931
    %v933 = vpop.f32.mrb[0].mxu0
    %v934 = vpop.f32.mrb[0].mxu0
    %v935 = vadd.f32 %v795, %v934
    %v936 = vpop.f32.mrb[0].mxu0
    %937 = vdwg.mxu0
    %v939 = vsel %vm796, %v785, 0
    %v942 = vsel %vm796, %v789, 0
    %944 = vmatprep.subr.bf16.mxu0 0
    %945 = vmatpush1.bf16.xpose.msra.mxu0 %v942
    %946 = vmatprep.subr.bf16.mxu0 0
    %947 = vmatpush1.bf16.xpose.msra.mxu0 0
    %948 = vmatprep.subr.bf16.mxu0 0
    %949 = vmatpush1.bf16.xpose.msra.mxu0 0
    %950 = vmatprep.subr.bf16.mxu0 0
    %951 = vmatpush1.bf16.xpose.msra.mxu0 0
    %952 = vmatprep.subr.bf16.mxu0 0
    %953 = vmatpush1.bf16.xpose.msra.mxu0 0
    %954 = vmatprep.subr.bf16.mxu0 0
    %955 = vmatpush1.bf16.xpose.msra.mxu0 0
    %956 = vmatprep.subr.bf16.mxu0 0
    %957 = vmatpush1.bf16.xpose.msra.mxu0 0
    %958 = vmatprep.subr.bf16.mxu0 0
    %959 = vmatpush1.bf16.xpose.msra.mxu0 0
    %960 = vmatprep.subr.bf16.mxu0 0
    %961 = vmatpush1.bf16.xpose.msra.mxu0 0
    %962 = vmatprep.subr.bf16.mxu0 0
    %963 = vmatpush1.bf16.xpose.msra.mxu0 0
    %964 = vmatprep.subr.bf16.mxu0 0
    %965 = vmatpush1.bf16.xpose.msra.mxu0 0
    %966 = vmatprep.subr.bf16.mxu0 0
    %967 = vmatpush1.bf16.xpose.msra.mxu0 0
    %968 = vmatprep.subr.bf16.mxu0 0
    %969 = vmatpush1.bf16.xpose.msra.mxu0 0
    %970 = vmatprep.subr.bf16.mxu0 0
    %971 = vmatpush1.bf16.xpose.msra.mxu0 0
    %972 = vmatprep.subr.bf16.mxu0 0
    %973 = vmatpush1.bf16.xpose.msra.mxu0 0
    %974 = vmatprep.subr.bf16.mxu0 0
    %975 = vmatpush1.bf16.xpose.msra.mxu0 0
    %976 = vmatprep.mubr.bf16.mxu0 0
    %977 = vmatmul.mubr.bf16.gmra.mrb[0].mxu0 %v939
    %v978 = vpop.f32.mrb[0].mxu0
    %v979 = vadd.f32 %v794, %v978
    %v980 = vpop.f32.mrb[0].mxu0
    %v981 = vpop.f32.mrb[0].mxu0
    %v982 = vadd.f32 %v795, %v981
    %v983 = vpop.f32.mrb[0].mxu0
    %984 = vdwg.mxu0
    %vm985 = vcmask 130048
    %v986 = vsel %vm985, %v838, -inf
    %987 = vmax.xlane.f32.xlu0 %v986
    %v988 = vpop.xlane.xlu0 %987
    %v989 = vsel %vm985, %v841, -inf
    %990 = vmax.xlane.f32.xlu0 %v989
    %v991 = vpop.xlane.xlu0 %990
    %v992 = vsel %vm985, %v885, -inf
    %993 = vmax.xlane.f32.xlu0 %v992
    %v994 = vpop.xlane.xlu0 %993
    %v995 = vsel %vm985, %v888, -inf
    %996 = vmax.xlane.f32.xlu0 %v995
    %v997 = vpop.xlane.xlu0 %996
    %v998 = vsel %vm985, %v932, -inf
    %999 = vmax.xlane.f32.xlu0 %v998
    %v1000 = vpop.xlane.xlu0 %999
    %v1001 = vsel %vm985, %v935, -inf
    %1002 = vmax.xlane.f32.xlu0 %v1001
    %v1003 = vpop.xlane.xlu0 %1002
    %v1004 = vsel %vm985, %v979, -inf
    %1005 = vmax.xlane.f32.xlu0 %v1004
    %v1006 = vpop.xlane.xlu0 %1005
    %v1007 = vsel %vm985, %v982, -inf
    %1008 = vmax.xlane.f32.xlu0 %v1007
    %v1009 = vpop.xlane.xlu0 %1008
    %v1010 = vsub.f32 %v838, %v988
    %v1011 = vsub.f32 %v841, %v991
    %v1012 = vsub.f32 %v885, %v994
    %v1013 = vsub.f32 %v888, %v997
    %v1014 = vsub.f32 %v932, %v1000
    %v1015 = vsub.f32 %v935, %v1003
    %v1016 = vsub.f32 %v979, %v1006
    %v1017 = vsub.f32 %v982, %v1009
    %v1018 = vmul.f32 %v1010, 1.442695
    %v1019 = vpow.pop %v1018
    %v1020 = vmul.f32 %v1011, 1.442695
    %v1021 = vpow.pop %v1020
    %v1022 = vmul.f32 %v1012, 1.442695
    %v1023 = vpow.pop %v1022
    %v1024 = vmul.f32 %v1013, 1.442695
    %v1025 = vpow.pop %v1024
    %v1026 = vmul.f32 %v1014, 1.442695
    %v1027 = vpow.pop %v1026
    %v1028 = vmul.f32 %v1015, 1.442695
    %v1029 = vpow.pop %v1028
    %v1030 = vmul.f32 %v1016, 1.442695
    %v1031 = vpow.pop %v1030
    %v1032 = vmul.f32 %v1017, 1.442695
    %v1033 = vpow.pop %v1032
    %v1034 = vsel %vm985, %v1019, 0.0
    %1035 = vadd.xlane.f32.xlu0 %v1034
    %v1036 = vpop.xlane.xlu0 %1035
    %v1037 = vsel %vm985, %v1021, 0.0
    %1038 = vadd.xlane.f32.xlu0 %v1037
    %v1039 = vpop.xlane.xlu0 %1038
    %v1040 = vsel %vm985, %v1023, 0.0
    %1041 = vadd.xlane.f32.xlu0 %v1040
    %v1042 = vpop.xlane.xlu0 %1041
    %v1043 = vsel %vm985, %v1025, 0.0
    %1044 = vadd.xlane.f32.xlu0 %v1043
    %v1045 = vpop.xlane.xlu0 %1044
    %v1046 = vsel %vm985, %v1027, 0.0
    %1047 = vadd.xlane.f32.xlu0 %v1046
    %v1048 = vpop.xlane.xlu0 %1047
    %v1049 = vsel %vm985, %v1029, 0.0
    %1050 = vadd.xlane.f32.xlu0 %v1049
    %v1051 = vpop.xlane.xlu0 %1050
    %v1052 = vsel %vm985, %v1031, 0.0
    %1053 = vadd.xlane.f32.xlu0 %v1052
    %v1054 = vpop.xlane.xlu0 %1053
    %v1055 = vsel %vm985, %v1033, 0.0
    %1056 = vadd.xlane.f32.xlu0 %v1055
    %v1057 = vpop.xlane.xlu0 %1056
    %v1058 = vrcp.pop %v1036
    %v1059 = vmul.f32 %v1019, %v1058
    %v1060 = vrcp.pop %v1039
    %v1061 = vmul.f32 %v1021, %v1060
    %v1062 = vrcp.pop %v1042
    %v1063 = vmul.f32 %v1023, %v1062
    %v1064 = vrcp.pop %v1045
    %v1065 = vmul.f32 %v1025, %v1064
    %v1066 = vrcp.pop %v1048
    %v1067 = vmul.f32 %v1027, %v1066
    %v1068 = vrcp.pop %v1051
    %v1069 = vmul.f32 %v1029, %v1068
    %v1070 = vrcp.pop %v1054
    %v1071 = vmul.f32 %v1031, %v1070
    %v1072 = vrcp.pop %v1057
    %v1073 = vmul.f32 %v1033, %v1072
    %v1074 = vpack.c.bf16 %v1061, %v1059
    %v1075 = vpack.c.bf16 %v1065, %v1063
    %v1076 = vpack.c.bf16 %v1069, %v1067
    %v1077 = vpack.c.bf16 %v1073, %v1071
    %v1079 = vsel %vm985, %v1074, 0
    %1081 = vmatprep.subr.bf16.mxu0 0
    %1082 = vmatpush1.bf16.msra.mxu0 %v790
    %1083 = vmatprep.subr.bf16.mxu0 0
    %1084 = vmatpush1.bf16.msra.mxu0 0
    %1085 = vmatprep.subr.bf16.mxu0 0
    %1086 = vmatpush1.bf16.msra.mxu0 0
    %1087 = vmatprep.subr.bf16.mxu0 0
    %1088 = vmatpush1.bf16.msra.mxu0 0
    %1089 = vmatprep.subr.bf16.mxu0 0
    %1090 = vmatpush1.bf16.msra.mxu0 0
    %1091 = vmatprep.subr.bf16.mxu0 0
    %1092 = vmatpush1.bf16.msra.mxu0 0
    %1093 = vmatprep.subr.bf16.mxu0 0
    %1094 = vmatpush1.bf16.msra.mxu0 0
    %1095 = vmatprep.subr.bf16.mxu0 0
    %1096 = vmatpush1.bf16.msra.mxu0 0
    %1097 = vmatprep.subr.bf16.mxu0 0
    %1098 = vmatpush1.bf16.msra.mxu0 0
    %1099 = vmatprep.subr.bf16.mxu0 0
    %1100 = vmatpush1.bf16.msra.mxu0 0
    %1101 = vmatprep.subr.bf16.mxu0 0
    %1102 = vmatpush1.bf16.msra.mxu0 0
    %1103 = vmatprep.subr.bf16.mxu0 0
    %1104 = vmatpush1.bf16.msra.mxu0 0
    %1105 = vmatprep.subr.bf16.mxu0 0
    %1106 = vmatpush1.bf16.msra.mxu0 0
    %1107 = vmatprep.subr.bf16.mxu0 0
    %1108 = vmatpush1.bf16.msra.mxu0 0
    %1109 = vmatprep.subr.bf16.mxu0 0
    %1110 = vmatpush1.bf16.msra.mxu0 0
    %1111 = vmatprep.subr.bf16.mxu0 0
    %1112 = vmatpush1.bf16.msra.mxu0 0
    %1113 = vmatprep.mubr.bf16.mxu0 0
    %1114 = vmatmul.mubr.bf16.gmra.mrb[0].mxu0 %v1079
    %v1115 = vpop.f32.mrb[0].mxu0
    %v1116 = vadd.f32 0.0, %v1115
    %v1117 = vpop.f32.mrb[0].mxu0
    %v1118 = vpop.f32.mrb[0].mxu0
    %v1119 = vadd.f32 0.0, %v1118
    %v1120 = vpop.f32.mrb[0].mxu0
    %1121 = vdwg.mxu0
    %v1123 = vsel %vm985, %v1075, 0
    %1125 = vmatprep.subr.bf16.mxu0 0
    %1126 = vmatpush1.bf16.msra.mxu0 %v791
    %1127 = vmatprep.subr.bf16.mxu0 0
    %1128 = vmatpush1.bf16.msra.mxu0 0
    %1129 = vmatprep.subr.bf16.mxu0 0
    %1130 = vmatpush1.bf16.msra.mxu0 0
    %1131 = vmatprep.subr.bf16.mxu0 0
    %1132 = vmatpush1.bf16.msra.mxu0 0
    %1133 = vmatprep.subr.bf16.mxu0 0
    %1134 = vmatpush1.bf16.msra.mxu0 0
    %1135 = vmatprep.subr.bf16.mxu0 0
    %1136 = vmatpush1.bf16.msra.mxu0 0
    %1137 = vmatprep.subr.bf16.mxu0 0
    %1138 = vmatpush1.bf16.msra.mxu0 0
    %1139 = vmatprep.subr.bf16.mxu0 0
    %1140 = vmatpush1.bf16.msra.mxu0 0
    %1141 = vmatprep.subr.bf16.mxu0 0
    %1142 = vmatpush1.bf16.msra.mxu0 0
    %1143 = vmatprep.subr.bf16.mxu0 0
    %1144 = vmatpush1.bf16.msra.mxu0 0
    %1145 = vmatprep.subr.bf16.mxu0 0
    %1146 = vmatpush1.bf16.msra.mxu0 0
    %1147 = vmatprep.subr.bf16.mxu0 0
    %1148 = vmatpush1.bf16.msra.mxu0 0
    %1149 = vmatprep.subr.bf16.mxu0 0
    %1150 = vmatpush1.bf16.msra.mxu0 0
    %1151 = vmatprep.subr.bf16.mxu0 0
    %1152 = vmatpush1.bf16.msra.mxu0 0
    %1153 = vmatprep.subr.bf16.mxu0 0
    %1154 = vmatpush1.bf16.msra.mxu0 0
    %1155 = vmatprep.subr.bf16.mxu0 0
    %1156 = vmatpush1.bf16.msra.mxu0 0
    %1157 = vmatprep.mubr.bf16.mxu0 0
    %1158 = vmatmul.mubr.bf16.gmra.mrb[0].mxu0 %v1123
    %v1159 = vpop.f32.mrb[0].mxu0
    %v1160 = vadd.f32 0.0, %v1159
    %v1161 = vpop.f32.mrb[0].mxu0
    %v1162 = vpop.f32.mrb[0].mxu0
    %v1163 = vadd.f32 0.0, %v1162
    %v1164 = vpop.f32.mrb[0].mxu0
    %1165 = vdwg.mxu0
    %v1167 = vsel %vm985, %v1076, 0
    %1169 = vmatprep.subr.bf16.mxu0 0
    %1170 = vmatpush1.bf16.msra.mxu0 %v792
    %1171 = vmatprep.subr.bf16.mxu0 0
    %1172 = vmatpush1.bf16.msra.mxu0 0
    %1173 = vmatprep.subr.bf16.mxu0 0
    %1174 = vmatpush1.bf16.msra.mxu0 0
    %1175 = vmatprep.subr.bf16.mxu0 0
    %1176 = vmatpush1.bf16.msra.mxu0 0
    %1177 = vmatprep.subr.bf16.mxu0 0
    %1178 = vmatpush1.bf16.msra.mxu0 0
    %1179 = vmatprep.subr.bf16.mxu0 0
    %1180 = vmatpush1.bf16.msra.mxu0 0
    %1181 = vmatprep.subr.bf16.mxu0 0
    %1182 = vmatpush1.bf16.msra.mxu0 0
    %1183 = vmatprep.subr.bf16.mxu0 0
    %1184 = vmatpush1.bf16.msra.mxu0 0
    %1185 = vmatprep.subr.bf16.mxu0 0
    %1186 = vmatpush1.bf16.msra.mxu0 0
    %1187 = vmatprep.subr.bf16.mxu0 0
    %1188 = vmatpush1.bf16.msra.mxu0 0
    %1189 = vmatprep.subr.bf16.mxu0 0
    %1190 = vmatpush1.bf16.msra.mxu0 0
    %1191 = vmatprep.subr.bf16.mxu0 0
    %1192 = vmatpush1.bf16.msra.mxu0 0
    %1193 = vmatprep.subr.bf16.mxu0 0
    %1194 = vmatpush1.bf16.msra.mxu0 0
    %1195 = vmatprep.subr.bf16.mxu0 0
    %1196 = vmatpush1.bf16.msra.mxu0 0
    %1197 = vmatprep.subr.bf16.mxu0 0
    %1198 = vmatpush1.bf16.msra.mxu0 0
    %1199 = vmatprep.subr.bf16.mxu0 0
    %1200 = vmatpush1.bf16.msra.mxu0 0
    %1201 = vmatprep.mubr.bf16.mxu0 0
    %1202 = vmatmul.mubr.bf16.gmra.mrb[0].mxu0 %v1167
    %v1203 = vpop.f32.mrb[0].mxu0
    %v1204 = vadd.f32 0.0, %v1203
    %v1205 = vpop.f32.mrb[0].mxu0
    %v1206 = vpop.f32.mrb[0].mxu0
    %v1207 = vadd.f32 0.0, %v1206
    %v1208 = vpop.f32.mrb[0].mxu0
    %1209 = vdwg.mxu0
    %v1211 = vsel %vm985, %v1077, 0
    %1213 = vmatprep.subr.bf16.mxu0 0
    %1214 = vmatpush1.bf16.msra.mxu0 %v793
    %1215 = vmatprep.subr.bf16.mxu0 0
    %1216 = vmatpush1.bf16.msra.mxu0 0
    %1217 = vmatprep.subr.bf16.mxu0 0
    %1218 = vmatpush1.bf16.msra.mxu0 0
    %1219 = vmatprep.subr.bf16.mxu0 0
    %1220 = vmatpush1.bf16.msra.mxu0 0
    %1221 = vmatprep.subr.bf16.mxu0 0
    %1222 = vmatpush1.bf16.msra.mxu0 0
    %1223 = vmatprep.subr.bf16.mxu0 0
    %1224 = vmatpush1.bf16.msra.mxu0 0
    %1225 = vmatprep.subr.bf16.mxu0 0
    %1226 = vmatpush1.bf16.msra.mxu0 0
    %1227 = vmatprep.subr.bf16.mxu0 0
    %1228 = vmatpush1.bf16.msra.mxu0 0
    %1229 = vmatprep.subr.bf16.mxu0 0
    %1230 = vmatpush1.bf16.msra.mxu0 0
    %1231 = vmatprep.subr.bf16.mxu0 0
    %1232 = vmatpush1.bf16.msra.mxu0 0
    %1233 = vmatprep.subr.bf16.mxu0 0
    %1234 = vmatpush1.bf16.msra.mxu0 0
    %1235 = vmatprep.subr.bf16.mxu0 0
    %1236 = vmatpush1.bf16.msra.mxu0 0
    %1237 = vmatprep.subr.bf16.mxu0 0
    %1238 = vmatpush1.bf16.msra.mxu0 0
    %1239 = vmatprep.subr.bf16.mxu0 0
    %1240 = vmatpush1.bf16.msra.mxu0 0
    %1241 = vmatprep.subr.bf16.mxu0 0
    %1242 = vmatpush1.bf16.msra.mxu0 0
    %1243 = vmatprep.subr.bf16.mxu0 0
    %1244 = vmatpush1.bf16.msra.mxu0 0
    %1245 = vmatprep.mubr.bf16.mxu0 0
    %1246 = vmatmul.mubr.bf16.gmra.mrb[0].mxu0 %v1211
    %v1247 = vpop.f32.mrb[0].mxu0
    %v1248 = vadd.f32 0.0, %v1247
    %v1249 = vpop.f32.mrb[0].mxu0
    %v1250 = vpop.f32.mrb[0].mxu0
    %v1251 = vadd.f32 0.0, %v1250
    %v1252 = vpop.f32.mrb[0].mxu0
    %1253 = vdwg.mxu0
    %v1254 = vpack.c.bf16 %v1119, %v1116
    %v1255 = vpack.c.bf16 %v1163, %v1160
    %v1256 = vpack.c.bf16 %v1207, %v1204
    %v1257 = vpack.c.bf16 %v1251, %v1248
    %v1258 = vld [vmem:[%s3] sm:$0xf]
    %v1259 = vld [vmem:[%s3 + $0x4] sm:$0xf]
    %v1260 = vld [vmem:[%s3 + $0x8] sm:$0xf]
    %v1261 = vld [vmem:[%s3 + $0xc] sm:$0xf]
    %v1263 = vsel %vm796, %v1254, 0
    %vm1265 = vcmask 1043456
    %v1267 = vsel %vm1265, %v1258, 0
    %1269 = vmatprep.subr.bf16.mxu0 0
    %1270 = vmatpush1.bf16.msra.mxu0 %v1267
    %1271 = vmatprep.subr.bf16.mxu0 0
    %1272 = vmatpush1.bf16.msra.mxu0 0
    %1273 = vmatprep.subr.bf16.mxu0 0
    %1274 = vmatpush1.bf16.msra.mxu0 0
    %1275 = vmatprep.subr.bf16.mxu0 0
    %1276 = vmatpush1.bf16.msra.mxu0 0
    %1277 = vmatprep.subr.bf16.mxu0 0
    %1278 = vmatpush1.bf16.msra.mxu0 0
    %1279 = vmatprep.subr.bf16.mxu0 0
    %1280 = vmatpush1.bf16.msra.mxu0 0
    %1281 = vmatprep.subr.bf16.mxu0 0
    %1282 = vmatpush1.bf16.msra.mxu0 0
    %1283 = vmatprep.subr.bf16.mxu0 0
    %1284 = vmatpush1.bf16.msra.mxu0 0
    %1285 = vmatprep.subr.bf16.mxu0 0
    %1286 = vmatpush1.bf16.msra.mxu0 0
    %1287 = vmatprep.subr.bf16.mxu0 0
    %1288 = vmatpush1.bf16.msra.mxu0 0
    %1289 = vmatprep.subr.bf16.mxu0 0
    %1290 = vmatpush1.bf16.msra.mxu0 0
    %1291 = vmatprep.subr.bf16.mxu0 0
    %1292 = vmatpush1.bf16.msra.mxu0 0
    %1293 = vmatprep.subr.bf16.mxu0 0
    %1294 = vmatpush1.bf16.msra.mxu0 0
    %1295 = vmatprep.subr.bf16.mxu0 0
    %1296 = vmatpush1.bf16.msra.mxu0 0
    %1297 = vmatprep.subr.bf16.mxu0 0
    %1298 = vmatpush1.bf16.msra.mxu0 0
    %1299 = vmatprep.subr.bf16.mxu0 0
    %1300 = vmatpush1.bf16.msra.mxu0 0
    %1301 = vmatprep.mubr.bf16.mxu0 0
    %1302 = vmatmul.mubr.bf16.gmra.mrb[0].mxu0 %v1263
    %v1303 = vpop.f32.mrb[0].mxu0
    %v1304 = vadd.f32 0.0, %v1303
    %v1305 = vpop.f32.mrb[0].mxu0
    %v1306 = vpop.f32.mrb[0].mxu0
    %v1307 = vadd.f32 0.0, %v1306
    %v1308 = vpop.f32.mrb[0].mxu0
    %1309 = vdwg.mxu0
    %v1311 = vsel %vm796, %v1255, 0
    %v1314 = vsel %vm1265, %v1259, 0
    %1316 = vmatprep.subr.bf16.mxu0 0
    %1317 = vmatpush1.bf16.msra.mxu0 %v1314
    %1318 = vmatprep.subr.bf16.mxu0 0
    %1319 = vmatpush1.bf16.msra.mxu0 0
    %1320 = vmatprep.subr.bf16.mxu0 0
    %1321 = vmatpush1.bf16.msra.mxu0 0
    %1322 = vmatprep.subr.bf16.mxu0 0
    %1323 = vmatpush1.bf16.msra.mxu0 0
    %1324 = vmatprep.subr.bf16.mxu0 0
    %1325 = vmatpush1.bf16.msra.mxu0 0
    %1326 = vmatprep.subr.bf16.mxu0 0
    %1327 = vmatpush1.bf16.msra.mxu0 0
    %1328 = vmatprep.subr.bf16.mxu0 0
    %1329 = vmatpush1.bf16.msra.mxu0 0
    %1330 = vmatprep.subr.bf16.mxu0 0
    %1331 = vmatpush1.bf16.msra.mxu0 0
    %1332 = vmatprep.subr.bf16.mxu0 0
    %1333 = vmatpush1.bf16.msra.mxu0 0
    %1334 = vmatprep.subr.bf16.mxu0 0
    %1335 = vmatpush1.bf16.msra.mxu0 0
    %1336 = vmatprep.subr.bf16.mxu0 0
    %1337 = vmatpush1.bf16.msra.mxu0 0
    %1338 = vmatprep.subr.bf16.mxu0 0
    %1339 = vmatpush1.bf16.msra.mxu0 0
    %1340 = vmatprep.subr.bf16.mxu0 0
    %1341 = vmatpush1.bf16.msra.mxu0 0
    %1342 = vmatprep.subr.bf16.mxu0 0
    %1343 = vmatpush1.bf16.msra.mxu0 0
    %1344 = vmatprep.subr.bf16.mxu0 0
    %1345 = vmatpush1.bf16.msra.mxu0 0
    %1346 = vmatprep.subr.bf16.mxu0 0
    %1347 = vmatpush1.bf16.msra.mxu0 0
    %1348 = vmatprep.mubr.bf16.mxu0 0
    %1349 = vmatmul.mubr.bf16.gmra.mrb[0].mxu0 %v1311
    %v1350 = vpop.f32.mrb[0].mxu0
    %v1351 = vadd.f32 0.0, %v1350
    %v1352 = vpop.f32.mrb[0].mxu0
    %v1353 = vpop.f32.mrb[0].mxu0
    %v1354 = vadd.f32 0.0, %v1353
    %v1355 = vpop.f32.mrb[0].mxu0
    %1356 = vdwg.mxu0
    %v1358 = vsel %vm796, %v1256, 0
    %v1361 = vsel %vm1265, %v1260, 0
    %1363 = vmatprep.subr.bf16.mxu0 0
    %1364 = vmatpush1.bf16.msra.mxu0 %v1361
    %1365 = vmatprep.subr.bf16.mxu0 0
    %1366 = vmatpush1.bf16.msra.mxu0 0
    %1367 = vmatprep.subr.bf16.mxu0 0
    %1368 = vmatpush1.bf16.msra.mxu0 0
    %1369 = vmatprep.subr.bf16.mxu0 0
    %1370 = vmatpush1.bf16.msra.mxu0 0
    %1371 = vmatprep.subr.bf16.mxu0 0
    %1372 = vmatpush1.bf16.msra.mxu0 0
    %1373 = vmatprep.subr.bf16.mxu0 0
    %1374 = vmatpush1.bf16.msra.mxu0 0
    %1375 = vmatprep.subr.bf16.mxu0 0
    %1376 = vmatpush1.bf16.msra.mxu0 0
    %1377 = vmatprep.subr.bf16.mxu0 0
    %1378 = vmatpush1.bf16.msra.mxu0 0
    %1379 = vmatprep.subr.bf16.mxu0 0
    %1380 = vmatpush1.bf16.msra.mxu0 0
    %1381 = vmatprep.subr.bf16.mxu0 0
    %1382 = vmatpush1.bf16.msra.mxu0 0
    %1383 = vmatprep.subr.bf16.mxu0 0
    %1384 = vmatpush1.bf16.msra.mxu0 0
    %1385 = vmatprep.subr.bf16.mxu0 0
    %1386 = vmatpush1.bf16.msra.mxu0 0
    %1387 = vmatprep.subr.bf16.mxu0 0
    %1388 = vmatpush1.bf16.msra.mxu0 0
    %1389 = vmatprep.subr.bf16.mxu0 0
    %1390 = vmatpush1.bf16.msra.mxu0 0
    %1391 = vmatprep.subr.bf16.mxu0 0
    %1392 = vmatpush1.bf16.msra.mxu0 0
    %1393 = vmatprep.subr.bf16.mxu0 0
    %1394 = vmatpush1.bf16.msra.mxu0 0
    %1395 = vmatprep.mubr.bf16.mxu0 0
    %1396 = vmatmul.mubr.bf16.gmra.mrb[0].mxu0 %v1358
    %v1397 = vpop.f32.mrb[0].mxu0
    %v1398 = vadd.f32 0.0, %v1397
    %v1399 = vpop.f32.mrb[0].mxu0
    %v1400 = vpop.f32.mrb[0].mxu0
    %v1401 = vadd.f32 0.0, %v1400
    %v1402 = vpop.f32.mrb[0].mxu0
    %1403 = vdwg.mxu0
    %v1405 = vsel %vm796, %v1257, 0
    %v1408 = vsel %vm1265, %v1261, 0
    %1410 = vmatprep.subr.bf16.mxu0 0
    %1411 = vmatpush1.bf16.msra.mxu0 %v1408
    %1412 = vmatprep.subr.bf16.mxu0 0
    %1413 = vmatpush1.bf16.msra.mxu0 0
    %1414 = vmatprep.subr.bf16.mxu0 0
    %1415 = vmatpush1.bf16.msra.mxu0 0
    %1416 = vmatprep.subr.bf16.mxu0 0
    %1417 = vmatpush1.bf16.msra.mxu0 0
    %1418 = vmatprep.subr.bf16.mxu0 0
    %1419 = vmatpush1.bf16.msra.mxu0 0
    %1420 = vmatprep.subr.bf16.mxu0 0
    %1421 = vmatpush1.bf16.msra.mxu0 0
    %1422 = vmatprep.subr.bf16.mxu0 0
    %1423 = vmatpush1.bf16.msra.mxu0 0
    %1424 = vmatprep.subr.bf16.mxu0 0
    %1425 = vmatpush1.bf16.msra.mxu0 0
    %1426 = vmatprep.subr.bf16.mxu0 0
    %1427 = vmatpush1.bf16.msra.mxu0 0
    %1428 = vmatprep.subr.bf16.mxu0 0
    %1429 = vmatpush1.bf16.msra.mxu0 0
    %1430 = vmatprep.subr.bf16.mxu0 0
    %1431 = vmatpush1.bf16.msra.mxu0 0
    %1432 = vmatprep.subr.bf16.mxu0 0
    %1433 = vmatpush1.bf16.msra.mxu0 0
    %1434 = vmatprep.subr.bf16.mxu0 0
    %1435 = vmatpush1.bf16.msra.mxu0 0
    %1436 = vmatprep.subr.bf16.mxu0 0
    %1437 = vmatpush1.bf16.msra.mxu0 0
    %1438 = vmatprep.subr.bf16.mxu0 0
    %1439 = vmatpush1.bf16.msra.mxu0 0
    %1440 = vmatprep.subr.bf16.mxu0 0
    %1441 = vmatpush1.bf16.msra.mxu0 0
    %1442 = vmatprep.mubr.bf16.mxu0 0
    %1443 = vmatmul.mubr.bf16.gmra.mrb[0].mxu0 %v1405
    %v1444 = vpop.f32.mrb[0].mxu0
    %v1445 = vadd.f32 0.0, %v1444
    %v1446 = vpop.f32.mrb[0].mxu0
    %v1447 = vpop.f32.mrb[0].mxu0
    %v1448 = vadd.f32 0.0, %v1447
    %v1449 = vpop.f32.mrb[0].mxu0
    %1450 = vdwg.mxu0
    %v1451 = vsel %vm50, %v1304, 0.0
    %v1452 = vsel %vm50, %v1351, 0.0
    %v1453 = vadd.f32 %v1451, %v1452
    %v1454 = vsel %vm50, %v1398, 0.0
    %v1455 = vadd.f32 %v1453, %v1454
    %v1456 = vsel %vm50, %v1445, 0.0
    %v1457 = vadd.f32 %v1455, %v1456
    %v1458 = vsel %vm50, %v1307, 0.0
    %v1459 = vsel %vm50, %v1354, 0.0
    %v1460 = vadd.f32 %v1458, %v1459
    %v1461 = vsel %vm50, %v1401, 0.0
    %v1462 = vadd.f32 %v1460, %v1461
    %v1463 = vsel %vm50, %v1448, 0.0
    %v1464 = vadd.f32 %v1462, %v1463
    %v1465 = vld [vmem:[%s4] sm:$0x1]
    %v1467 = vlaneseq
    %v1468 = vshrl.u32 %v1467, 7
    %v1469 = vsub.s32 0, %v1468
    %v1470 = vrot.slane %v1465, %v1469
    %v1472 = vadd.f32 %v1457, %v1470
    %v1473 = vadd.f32 %v1464, %v1470
    %v1474 = vadd.f32 %v46, %v1472
    %v1475 = vadd.f32 %v47, %v1473
    %v1476 = vld [vmem:[%s7] sm:$0x1]
    %v1477 = vld [vmem:[%s8] sm:$0x1]
    %v1478 = vsel %vm50, %v1474, 0.0
    %1479 = vadd.xlane.f32.xlu0 %v1478
    %v1480 = vpop.xlane.xlu0 %1479
    %v1481 = vsel %vm50, %v1475, 0.0
    %1482 = vadd.xlane.f32.xlu0 %v1481
    %v1483 = vpop.xlane.xlu0 %1482
    %v1484 = vmul.f32 %v1480, %v57
    %v1485 = vmul.f32 %v1483, %v57
    %v1486 = vsub.f32 %v1474, %v1484
    %v1487 = vsub.f32 %v1475, %v1485
    %v1488 = vmul.f32 %v1486, %v1486
    %v1489 = vmul.f32 %v1487, %v1487
    %v1490 = vsel %vm50, %v1488, 0.0
    %1491 = vadd.xlane.f32.xlu0 %v1490
    %v1492 = vpop.xlane.xlu0 %1491
    %v1493 = vsel %vm50, %v1489, 0.0
    %1494 = vadd.xlane.f32.xlu0 %v1493
    %v1495 = vpop.xlane.xlu0 %1494
    %v1496 = vmul.f32 %v1492, %v57
    %v1497 = vmul.f32 %v1495, %v57
    %v1498 = vadd.f32 %v1496, 1e-05
    %v1499 = vadd.f32 %v1497, 1e-05
    %v1500 = vrsqrt.pop %v1498
    %v1501 = vrsqrt.pop %v1499
    %v1502 = vmul.f32 %v1486, %v1500
    %v1503 = vmul.f32 %v1487, %v1501
    %v1505 = vlaneseq
    %v1506 = vshrl.u32 %v1505, 7
    %v1507 = vsub.s32 0, %v1506
    %v1508 = vrot.slane %v1476, %v1507
    %v1510 = vmul.f32 %v1502, %v1508
    %v1511 = vmul.f32 %v1503, %v1508
    %v1513 = vlaneseq
    %v1514 = vshrl.u32 %v1513, 7
    %v1515 = vsub.s32 0, %v1514
    %v1516 = vrot.slane %v1477, %v1515
    %v1518 = vadd.f32 %v1510, %v1516
    %v1519 = vadd.f32 %v1511, %v1516
    %v1520 = vpack.c.bf16 %v1519, %v1518
    %v1521 = vld [vmem:[%s9] sm:$0xf]
    %v1522 = vld [vmem:[%s9 + $0x4] sm:$0xf]
    %v1523 = vld [vmem:[%s9 + $0x8] sm:$0xf]
    %v1524 = vld [vmem:[%s9 + $0xc] sm:$0xf]
    %v1525 = vld [vmem:[%s10] sm:$0x1]
    %v1527 = vlaneseq
    %v1528 = vshrl.u32 %v1527, 7
    %v1529 = vsub.s32 0, %v1528
    %v1530 = vrot.slane %v1525, %v1529
    %v1536 = vunpack.c.l.b16 %v1521
    %v1537 = vunpack.c.l.b16 %v1522
    %v1538 = vunpack.c.l.b16 %v1523
    %v1539 = vunpack.c.l.b16 %v1524
    %v1540 = vpack.c.b16 %v1537, %v1536
    %v1541 = vpack.c.b16 %v1539, %v1538
    %v1545 = vsel %vm50, %v1520, 0
    %1547 = vmatprep.subr.bf16.mxu0 0
    %1548 = vmatpush1.bf16.msra.mxu0 %v1540
    %1549 = vmatprep.subr.bf16.mxu0 0
    %1550 = vmatpush1.bf16.msra.mxu0 %v1541
    %1551 = vmatprep.subr.bf16.mxu0 0
    %1552 = vmatpush1.bf16.msra.mxu0 0
    %1553 = vmatprep.subr.bf16.mxu0 0
    %1554 = vmatpush1.bf16.msra.mxu0 0
    %1555 = vmatprep.subr.bf16.mxu0 0
    %1556 = vmatpush1.bf16.msra.mxu0 0
    %1557 = vmatprep.subr.bf16.mxu0 0
    %1558 = vmatpush1.bf16.msra.mxu0 0
    %1559 = vmatprep.subr.bf16.mxu0 0
    %1560 = vmatpush1.bf16.msra.mxu0 0
    %1561 = vmatprep.subr.bf16.mxu0 0
    %1562 = vmatpush1.bf16.msra.mxu0 0
    %1563 = vmatprep.subr.bf16.mxu0 0
    %1564 = vmatpush1.bf16.msra.mxu0 0
    %1565 = vmatprep.subr.bf16.mxu0 0
    %1566 = vmatpush1.bf16.msra.mxu0 0
    %1567 = vmatprep.subr.bf16.mxu0 0
    %1568 = vmatpush1.bf16.msra.mxu0 0
    %1569 = vmatprep.subr.bf16.mxu0 0
    %1570 = vmatpush1.bf16.msra.mxu0 0
    %1571 = vmatprep.subr.bf16.mxu0 0
    %1572 = vmatpush1.bf16.msra.mxu0 0
    %1573 = vmatprep.subr.bf16.mxu0 0
    %1574 = vmatpush1.bf16.msra.mxu0 0
    %1575 = vmatprep.subr.bf16.mxu0 0
    %1576 = vmatpush1.bf16.msra.mxu0 0
    %1577 = vmatprep.subr.bf16.mxu0 0
    %1578 = vmatpush1.bf16.msra.mxu0 0
    %1579 = vmatprep.mubr.bf16.mxu0 0
    %1580 = vmatmul.mubr.bf16.gmra.mrb[0].mxu0 %v1545
    %v1581 = vpop.f32.mrb[0].mxu0
    %v1582 = vadd.f32 %v1530, %v1581
    %v1583 = vpop.f32.mrb[0].mxu0
    %v1584 = vpop.f32.mrb[0].mxu0
    %v1585 = vadd.f32 %v1530, %v1584
    %v1586 = vpop.f32.mrb[0].mxu0
    %1587 = vdwg.mxu0
    %v1588 = vmul.f32 %v1582, 0.5
    %v1589 = vmul.f32 %v1585, 0.5
    %v1590 = vmul.f32 %v1582, 0.70710677
    %v1591 = vmul.f32 %v1585, 0.70710677
    %v1592 = vand.u32 2147483647, %v1590
    %v1593 = vand.u32 2147483647, %v1591
    %v1594 = vmul.f32 %v1592, 0.3275911
    %v1595 = vmul.f32 %v1593, 0.3275911
    %v1596 = vadd.f32 %v1594, 1.0
    %v1597 = vadd.f32 %v1595, 1.0
    %v1598 = vrcp.pop %v1596
    %v1599 = vmul.f32 1.0, %v1598
    %v1600 = vrcp.pop %v1597
    %v1601 = vmul.f32 1.0, %v1600
    %v1602 = vmul.f32 %v1599, 1.0614054
    %v1603 = vmul.f32 %v1601, 1.0614054
    %v1604 = vadd.f32 %v1602, -1.4531521
    %v1605 = vadd.f32 %v1603, -1.4531521
    %v1606 = vmul.f32 %v1604, %v1599
    %v1607 = vmul.f32 %v1605, %v1601
    %v1608 = vadd.f32 %v1606, 1.4214138
    %v1609 = vadd.f32 %v1607, 1.4214138
    %v1610 = vmul.f32 %v1608, %v1599
    %v1611 = vmul.f32 %v1609, %v1601
    %v1612 = vadd.f32 %v1610, -0.28449672
    %v1613 = vadd.f32 %v1611, -0.28449672
    %v1614 = vmul.f32 %v1612, %v1599
    %v1615 = vmul.f32 %v1613, %v1601
    %v1616 = vadd.f32 %v1614, 0.2548296
    %v1617 = vadd.f32 %v1615, 0.2548296
    %v1618 = vmul.f32 %v1616, %v1599
    %v1619 = vmul.f32 %v1617, %v1601
    %v1620 = vsub.f32 0.0, %v1592
    %v1621 = vsub.f32 0.0, %v1593
    %v1622 = vmul.f32 %v1620, %v1592
    %v1623 = vmul.f32 %v1621, %v1593
    %v1624 = vmul.f32 %v1622, 1.442695
    %v1625 = vpow.pop %v1624
    %v1626 = vmul.f32 %v1623, 1.442695
    %v1627 = vpow.pop %v1626
    %v1628 = vmul.f32 %v1618, %v1625
    %v1629 = vmul.f32 %v1619, %v1627
    %v1630 = vsub.f32 1.0, %v1628
    %v1631 = vsub.f32 1.0, %v1629
    %vm1632 = vcmp.ge.f32.partialorder %v1590, 0.0
    %vm1633 = vcmp.ge.f32.partialorder %v1591, 0.0
    %v1634 = vsub.f32 0.0, %v1630
    %v1635 = vsub.f32 0.0, %v1631
    %v1636 = vsel %vm1632, %v1630, %v1634
    %v1637 = vsel %vm1633, %v1631, %v1635
    %v1638 = vadd.f32 %v1636, 1.0
    %v1639 = vadd.f32 %v1637, 1.0
    %v1640 = vmul.f32 %v1588, %v1638
    %v1641 = vmul.f32 %v1589, %v1639
    %v1642 = vpack.c.bf16 %v1641, %v1640
    %v1643 = vld [vmem:[%s11] sm:$0xf]
    %v1644 = vld [vmem:[%s11 + $0x4] sm:$0xf]
    %v1645 = vld [vmem:[%s11 + $0x8] sm:$0xf]
    %v1646 = vld [vmem:[%s11 + $0xc] sm:$0xf]
    %v1647 = vld [vmem:[%s11 + $0x10] sm:$0xf]
    %v1648 = vld [vmem:[%s11 + $0x14] sm:$0xf]
    %v1649 = vld [vmem:[%s11 + $0x18] sm:$0xf]
    %v1650 = vld [vmem:[%s11 + $0x1c] sm:$0xf]
    %v1651 = vld [vmem:[%s11 + $0x20] sm:$0xf]
    %v1652 = vld [vmem:[%s11 + $0x24] sm:$0xf]
    %v1653 = vld [vmem:[%s11 + $0x28] sm:$0xf]
    %v1654 = vld [vmem:[%s11 + $0x2c] sm:$0xf]
    %v1655 = vld [vmem:[%s11 + $0x30] sm:$0xf]
    %v1656 = vld [vmem:[%s11 + $0x34] sm:$0xf]
    %v1657 = vld [vmem:[%s11 + $0x38] sm:$0xf]
    %v1658 = vld [vmem:[%s11 + $0x3c] sm:$0xf]
    %v1659 = vld [vmem:[%s12] sm:$0x1]
    %v1661 = vlaneseq
    %v1662 = vshrl.u32 %v1661, 7
    %v1663 = vsub.s32 0, %v1662
    %v1664 = vrot.slane %v1659, %v1663
    %v1682 = vunpack.c.l.b16 %v1643
    %v1683 = vunpack.c.l.b16 %v1644
    %v1684 = vunpack.c.l.b16 %v1645
    %v1685 = vunpack.c.l.b16 %v1646
    %v1686 = vunpack.c.l.b16 %v1647
    %v1687 = vunpack.c.l.b16 %v1648
    %v1688 = vunpack.c.l.b16 %v1649
    %v1689 = vunpack.c.l.b16 %v1650
    %v1690 = vunpack.c.l.b16 %v1651
    %v1691 = vunpack.c.l.b16 %v1652
    %v1692 = vunpack.c.l.b16 %v1653
    %v1693 = vunpack.c.l.b16 %v1654
    %v1694 = vunpack.c.l.b16 %v1655
    %v1695 = vunpack.c.l.b16 %v1656
    %v1696 = vunpack.c.l.b16 %v1657
    %v1697 = vunpack.c.l.b16 %v1658
    %v1698 = vpack.c.b16 %v1683, %v1682
    %v1699 = vpack.c.b16 %v1685, %v1684
    %v1700 = vpack.c.b16 %v1687, %v1686
    %v1701 = vpack.c.b16 %v1689, %v1688
    %v1702 = vpack.c.b16 %v1691, %v1690
    %v1703 = vpack.c.b16 %v1693, %v1692
    %v1704 = vpack.c.b16 %v1695, %v1694
    %v1705 = vpack.c.b16 %v1697, %v1696
    %1714 = vmatprep.subr.bf16.mxu0 0
    %1715 = vmatpush1.bf16.msra.mxu0 %v1698
    %1716 = vmatprep.subr.bf16.mxu0 0
    %1717 = vmatpush1.bf16.msra.mxu0 %v1699
    %1718 = vmatprep.subr.bf16.mxu0 0
    %1719 = vmatpush1.bf16.msra.mxu0 %v1700
    %1720 = vmatprep.subr.bf16.mxu0 0
    %1721 = vmatpush1.bf16.msra.mxu0 %v1701
    %1722 = vmatprep.subr.bf16.mxu0 0
    %1723 = vmatpush1.bf16.msra.mxu0 %v1702
    %1724 = vmatprep.subr.bf16.mxu0 0
    %1725 = vmatpush1.bf16.msra.mxu0 %v1703
    %1726 = vmatprep.subr.bf16.mxu0 0
    %1727 = vmatpush1.bf16.msra.mxu0 %v1704
    %1728 = vmatprep.subr.bf16.mxu0 0
    %1729 = vmatpush1.bf16.msra.mxu0 %v1705
    %1730 = vmatprep.subr.bf16.mxu0 0
    %1731 = vmatpush1.bf16.msra.mxu0 0
    %1732 = vmatprep.subr.bf16.mxu0 0
    %1733 = vmatpush1.bf16.msra.mxu0 0
    %1734 = vmatprep.subr.bf16.mxu0 0
    %1735 = vmatpush1.bf16.msra.mxu0 0
    %1736 = vmatprep.subr.bf16.mxu0 0
    %1737 = vmatpush1.bf16.msra.mxu0 0
    %1738 = vmatprep.subr.bf16.mxu0 0
    %1739 = vmatpush1.bf16.msra.mxu0 0
    %1740 = vmatprep.subr.bf16.mxu0 0
    %1741 = vmatpush1.bf16.msra.mxu0 0
    %1742 = vmatprep.subr.bf16.mxu0 0
    %1743 = vmatpush1.bf16.msra.mxu0 0
    %1744 = vmatprep.subr.bf16.mxu0 0
    %1745 = vmatpush1.bf16.msra.mxu0 0
    %1746 = vmatprep.mubr.bf16.mxu0 0
    %1747 = vmatmul.mubr.bf16.gmra.mrb[0].mxu0 %v1642
    %v1748 = vpop.f32.mrb[0].mxu0
    %v1749 = vadd.f32 %v1664, %v1748
    %v1750 = vpop.f32.mrb[0].mxu0
    %v1751 = vpop.f32.mrb[0].mxu0
    %v1752 = vadd.f32 %v1664, %v1751
    %v1753 = vpop.f32.mrb[0].mxu0
    %1754 = vdwg.mxu0
    %v1755 = vadd.f32 %v1474, %v1749
    %v1756 = vadd.f32 %v1475, %v1752
    %1757 = vst.msk [vmem:[#allocation2] sm:$0xff] %vm50, %v1755
    %1758 = vst.msk [vmem:[#allocation2 + $0x8] sm:$0xff] %vm50, %v1756
    // Predicated region
    $region54: #{self_attention_block.1} parent=1 // pred_check
      _
    $region55: #{self_attention_block.1} parent=1 // pred_check_branch
      %1760 = sbr.rel (0) target = $region57
    $region56: #{self_attention_block.1} parent=1 // pred_region
      %s1762 = ssub.s32 256, 256
      %1763 = vsyncadd [#allocation3], %s1762
      %s1764 = sshll.u32 [#allocation2], 4
      %s1765 = int_to_ptr.vmem [resolvable:$true] %s1764
      %1770 = dma.vmem_to_hbm [thread:$0]  %s1765, 256, %s13, [#allocation3], 128, 128, 8
    $region57: #{self_attention_block.1} parent=1 // pred_fallthru
      _
    // Predicated region
    $region58: #{self_attention_block.1} parent=1 // pred_check
      _
    $region59: #{self_attention_block.1} parent=1 // pred_check_branch
      %1772 = sbr.rel (0) target = $region61
    $region60: #{self_attention_block.1} parent=1 // pred_region
      %1773 = dma.done [#allocation3], 256
    $region61: #{self_attention_block.1} parent=1 // pred_fallthru
      _
    %1774 = vsyncpa [#allocation3], 1

</llo_original>
